<compile_context>
chip_gen: v6e
topology: v6e:2x2x1
jax: 0.10.0
libtpu: 0.0.40
codegen_flags: <defaults>
</compile_context>

<pallas_src>
import functools
import numpy as np
import jax
import jax.numpy as jnp
from jax import lax
from jax.experimental import pallas as pl
from jax.experimental.pallas import tpu as pltpu

# ---------------- configuration (small, consistent with the module) ----------
B = 2
H = W = 8                 # reso
WS = 4                    # window_size
SHIFT = 0                 # shift_size (fused path assumes 0)
DIM = 16                  # channels C
NUM_HEADS = 4
MLP_RATIO = 4.0
N = H * W                 # tokens
NW = WS * WS              # tokens per window
HEAD_DIM = DIM // NUM_HEADS
SCALE = HEAD_DIM ** -0.5
HIDDEN = int(DIM * MLP_RATIO)
EPS = 1e-5
MASK_VALUE = -1e9         # off-window additive mask (exp underflows to 0 in f32)

assert SHIFT == 0, "fused window-mask path assumes shift_size == 0"


# ---------------------------- fused Pallas kernel -----------------------------
def _swin_block_kernel(x_ref, g1_ref, b1_ref, wqkv_ref, bqkv_ref,
                       wproj_ref, bproj_ref, hmask_ref, abias_ref,
                       g2_ref, b2_ref, w1_ref, b1m_ref, w2_ref, b2m_ref,
                       o_ref, *, num_heads, scale):
    x = x_ref[0]                                               # (N, C)
    n, c = x.shape

    # ---------------- LayerNorm 1 ----------------
    mu = jnp.mean(x, axis=-1, keepdims=True)
    var = jnp.mean((x - mu) * (x - mu), axis=-1, keepdims=True)
    xn = (x - mu) * lax.rsqrt(var + EPS) * g1_ref[0] + b1_ref[0]

    # -------- QKV over all windows/tokens at once (single MXU pass) --------
    qkv = jnp.dot(xn, wqkv_ref[...], preferred_element_type=jnp.float32) + bqkv_ref[0]
    q = qkv[:, 0 * c:1 * c] * scale                            # fold scale into q (N, C)
    k = qkv[:, 1 * c:2 * c]
    v = qkv[:, 2 * c:3 * c]

    # -------- head-stacked attention: row (h*N + i) = query i of head h ------
    hm = hmask_ref[...]                                        # (nh*N, C) 0/1 head mask
    q_stk = jnp.concatenate([q] * num_heads, axis=0) * hm      # (nh*N, C)
    s = jnp.dot(q_stk, k.T, preferred_element_type=jnp.float32)
    s = s + abias_ref[...]                                     # rel-pos bias + window mask
    s = s - jnp.max(s, axis=-1, keepdims=True)
    e = jnp.exp(s)
    p = e * pl.reciprocal(jnp.sum(e, axis=-1, keepdims=True), approx=True)
    o_stk = jnp.dot(p, v, preferred_element_type=jnp.float32) * hm          # (nh*N, C)
    # Reduce over heads BEFORE the projection (linear, so order is free) ->
    # proj matmul runs on (N, C) rows instead of (nh*N, C).
    o_full = jnp.sum(o_stk.reshape(num_heads, n, c), axis=0)                # (N, C)
    y = jnp.dot(o_full, wproj_ref[...], preferred_element_type=jnp.float32) + bproj_ref[0]

    # ---------------- residual 1 ----------------
    x2 = x + y

    # ---------------- LayerNorm 2 + MLP + residual 2 ----------------
    mu2 = jnp.mean(x2, axis=-1, keepdims=True)
    var2 = jnp.mean((x2 - mu2) * (x2 - mu2), axis=-1, keepdims=True)
    xn2 = (x2 - mu2) * lax.rsqrt(var2 + EPS) * g2_ref[0] + b2_ref[0]
    h1 = jnp.dot(xn2, w1_ref[...], preferred_element_type=jnp.float32) + b1m_ref[0]
    h1 = 0.5 * h1 * (1.0 + lax.erf(h1 * np.float32(1.0 / np.sqrt(2.0))))    # exact GELU
    out = x2 + jnp.dot(h1, w2_ref[...], preferred_element_type=jnp.float32) + b2m_ref[0]
    o_ref[0] = out.astype(o_ref.dtype)


# ---------------------------- pallas_call wrapper ------------------------------
def swin_block_forward(x, p):
    b, n, c = x.shape
    hid = p["w1"].shape[1]
    nhn = p["hmask"].shape[0]                                  # num_heads * N
    kernel = functools.partial(_swin_block_kernel, num_heads=NUM_HEADS, scale=SCALE)

    def _full(shape):
        nd = len(shape)
        return pl.BlockSpec(shape, lambda i, _nd=nd: (0,) * _nd)

    return pl.pallas_call(
        kernel,
        out_shape=jax.ShapeDtypeStruct((b, n, c), x.dtype),
        grid=(b,),
        in_specs=[
            pl.BlockSpec((1, n, c), lambda i: (i, 0, 0)),      # x
            _full((1, c)), _full((1, c)),                      # g1, b1
            _full((c, 3 * c)), _full((1, 3 * c)),              # wqkv, bqkv
            _full((c, c)), _full((1, c)),                      # wproj, bproj
            _full((nhn, c)),                                   # head mask
            _full((nhn, n)),                                   # attn bias (rpb + window mask)
            _full((1, c)), _full((1, c)),                      # g2, b2
            _full((c, hid)), _full((1, hid)),                  # w1, b1m
            _full((hid, c)), _full((1, c)),                    # w2, b2m
        ],
        out_specs=pl.BlockSpec((1, n, c), lambda i: (i, 0, 0)),
        compiler_params=pltpu.CompilerParams(dimension_semantics=("parallel",)),
    )(x, p["g1"], p["b1"], p["wqkv"], p["bqkv"], p["wproj"], p["bproj"],
      p["hmask"], p["abias"], p["g2"], p["b2"], p["w1"], p["b1m"], p["w2"], p["b2m"])


# ----------------------- pure-JAX reference (for checking) --------------------
def window_partition(x):           # (B, H, W, C) -> (B*nW, WS*WS, C)   [reference only]
    b = x.shape[0]
    c = x.shape[-1]
    x = x.reshape(b, H // WS, WS, W // WS, WS, c)
    x = x.transpose(0, 1, 3, 2, 4, 5)
    return x.reshape(-1, WS * WS, c)


def window_reverse(xw):            # (B*nW, WS*WS, C) -> (B, H, W, C)   [reference only]
    c = xw.shape[-1]
    x = xw.reshape(-1, H // WS, W // WS, WS, WS, c)
    x = x.transpose(0, 1, 3, 2, 4, 5)
    return x.reshape(-1, H, W, c)


def _ref_ln(x, g, b):
    mu = jnp.mean(x, -1, keepdims=True)
    var = jnp.mean((x - mu) ** 2, -1, keepdims=True)
    return (x - mu) / jnp.sqrt(var + EPS) * g + b


def ref_forward(x, p):
    b, n, c = x.shape
    shortcut = x
    xn = _ref_ln(x, p["g1"][0], p["b1"][0]).reshape(b, H, W, c)
    xw = window_partition(xn)                                  # (Bw, NW, C)
    bw = xw.shape[0]
    qkv = xw @ p["wqkv"] + p["bqkv"][0]                        # (Bw, NW, 3C)
    qkv = qkv.reshape(bw, NW, 3, NUM_HEADS, HEAD_DIM).transpose(2, 0, 3, 1, 4)
    q, k, v = qkv[0], qkv[1], qkv[2]                           # (Bw, nH, NW, hd)
    attn = jnp.einsum("bhqd,bhkd->bhqk", q, k) * SCALE
    attn = attn + p["rpb"][None]
    attn = jax.nn.softmax(attn, axis=-1)
    o = jnp.einsum("bhqk,bhkd->bhqd", attn, v)
    o = o.transpose(0, 2, 1, 3).reshape(bw, NW, c)
    o = o @ p["wproj"] + p["bproj"][0]
    x2 = window_reverse(o).reshape(b, n, c) + shortcut
    xn2 = _ref_ln(x2, p["g2"][0], p["b2"][0])
    h1 = xn2 @ p["w1"] + p["b1m"][0]
    h1 = 0.5 * h1 * (1.0 + lax.erf(h1 / jnp.sqrt(2.0)))
    return x2 + (h1 @ p["w2"] + p["b2m"][0])


# ---------------------------- parameter init ----------------------------------
def init_params(key):
    ks = jax.random.split(key, 8)
    f32 = jnp.float32
    params = {
        "g1": jnp.ones((1, DIM), f32),
        "b1": jnp.zeros((1, DIM), f32),
        "wqkv": 0.02 * jax.random.normal(ks[0], (DIM, 3 * DIM), f32),
        "bqkv": 0.02 * jax.random.normal(ks[1], (1, 3 * DIM), f32),
        "wproj": 0.02 * jax.random.normal(ks[2], (DIM, DIM), f32),
        "bproj": 0.02 * jax.random.normal(ks[3], (1, DIM), f32),
        "g2": jnp.ones((1, DIM), f32),
        "b2": jnp.zeros((1, DIM), f32),
        "w1": 0.02 * jax.random.normal(ks[4], (DIM, HIDDEN), f32),
        "b1m": jnp.zeros((1, HIDDEN), f32),
        "w2": 0.02 * jax.random.normal(ks[5], (HIDDEN, DIM), f32),
        "b2m": jnp.zeros((1, DIM), f32),
    }
    # relative position bias table + index (exactly as in the torch __init__)
    table = 0.02 * jax.random.normal(ks[6], ((2 * WS - 1) * (2 * WS - 1), NUM_HEADS), f32)
    coords = np.stack(np.meshgrid(np.arange(WS), np.arange(WS), indexing="ij"))
    coords_flatten = coords.reshape(2, -1)
    rel = coords_flatten[:, :, None] - coords_flatten[:, None, :]
    rel = rel.transpose(1, 2, 0).astype(np.int64)
    rel[:, :, 0] += WS - 1
    rel[:, :, 1] += WS - 1
    rel[:, :, 0] *= 2 * WS - 1
    rel_index = rel.sum(-1)                                    # (NW, NW)
    rpb = table[jnp.asarray(rel_index.reshape(-1))].reshape(NW, NW, NUM_HEADS)
    params["rpb"] = jnp.transpose(rpb, (2, 0, 1))              # (nH, NW, NW)

    # ---- fused-kernel constants ------------------------------------------------
    # (a) additive attention bias in token space: rel-pos bias inside a window,
    #     MASK_VALUE across windows -> softmax over the full 64 keys equals the
    #     per-window softmax exactly (off-window exp underflows to 0).
    hi = np.arange(N) // W
    wi = np.arange(N) % W
    win = (hi // WS) * (W // WS) + (wi // WS)                  # window id per token
    pos = (hi % WS) * WS + (wi % WS)                           # within-window index
    same = win[:, None] == win[None, :]                        # (N, N)
    rpb_np = np.asarray(params["rpb"])                         # (nH, NW, NW)
    abias = np.where(same[None], rpb_np[:, pos[:, None], pos[None, :]], MASK_VALUE)
    params["abias"] = jnp.asarray(abias.reshape(NUM_HEADS * N, N), dtype=jnp.float32)
    # (b) 0/1 head mask for the head-stacked (nh*N, C) layout.
    col_head = np.arange(DIM) // HEAD_DIM
    row_head = np.repeat(np.arange(NUM_HEADS), N)
    params["hmask"] = jnp.asarray(
        (row_head[:, None] == col_head[None, :]).astype(np.float32))
    return params


# ---------------------------- main ---------------------------------------------
if __name__ == "__main__":
    key = jax.random.PRNGKey(0)
    kx, kp = jax.random.split(key)
    x = jax.random.normal(kx, (B, N, DIM), jnp.float32)
    params = init_params(kp)

    out = jax.jit(swin_block_forward)(x, params)
    out = jax.block_until_ready(out)

    ref = ref_forward(x, params)
    assert out.shape == (B, N, DIM)
    max_err = float(jnp.max(jnp.abs(out - ref)))
    assert bool(jnp.allclose(out, ref, rtol=2e-3, atol=2e-3)), \
        f"mismatch vs reference (max abs err {max_err})"

    print("KERNEL_OK")
</pallas_src>

<mosaic_0001>
module attributes {stable_mosaic.version = 11 : i64} {
  func.func @_swin_block_kernel(%arg0: i32, %arg1: memref<1x64x16xf32, #tpu.memory_space<vmem>>, %arg2: memref<1x16xf32, #tpu.memory_space<vmem>>, %arg3: memref<1x16xf32, #tpu.memory_space<vmem>>, %arg4: memref<16x48xf32, #tpu.memory_space<vmem>>, %arg5: memref<1x48xf32, #tpu.memory_space<vmem>>, %arg6: memref<16x16xf32, #tpu.memory_space<vmem>>, %arg7: memref<1x16xf32, #tpu.memory_space<vmem>>, %arg8: memref<256x16xf32, #tpu.memory_space<vmem>>, %arg9: memref<256x64xf32, #tpu.memory_space<vmem>>, %arg10: memref<1x16xf32, #tpu.memory_space<vmem>>, %arg11: memref<1x16xf32, #tpu.memory_space<vmem>>, %arg12: memref<16x64xf32, #tpu.memory_space<vmem>>, %arg13: memref<1x64xf32, #tpu.memory_space<vmem>>, %arg14: memref<64x16xf32, #tpu.memory_space<vmem>>, %arg15: memref<1x16xf32, #tpu.memory_space<vmem>>, %arg16: memref<1x64x16xf32, #tpu.memory_space<vmem>>) attributes {dimension_semantics = [#tpu.dimension_semantics<parallel>], iteration_bounds = array<i64: 2>, scalar_prefetch = 0 : i64, scratch_operands = 0 : i64, tpu.core_type = #tpu.core_type<tc>, window_params = [{transform_indices = @transform_0, window_bounds = array<i64: 1, 64, 16>}, {pipeline_mode = #tpu.pipeline_mode<synchronous>, transform_indices = @transform_1, window_bounds = array<i64: 1, 16>}, {pipeline_mode = #tpu.pipeline_mode<synchronous>, transform_indices = @transform_2, window_bounds = array<i64: 1, 16>}, {pipeline_mode = #tpu.pipeline_mode<synchronous>, transform_indices = @transform_3, window_bounds = array<i64: 16, 48>}, {pipeline_mode = #tpu.pipeline_mode<synchronous>, transform_indices = @transform_4, window_bounds = array<i64: 1, 48>}, {pipeline_mode = #tpu.pipeline_mode<synchronous>, transform_indices = @transform_5, window_bounds = array<i64: 16, 16>}, {pipeline_mode = #tpu.pipeline_mode<synchronous>, transform_indices = @transform_6, window_bounds = array<i64: 1, 16>}, {pipeline_mode = #tpu.pipeline_mode<synchronous>, transform_indices = @transform_7, window_bounds = array<i64: 256, 16>}, {pipeline_mode = #tpu.pipeline_mode<synchronous>, transform_indices = @transform_8, window_bounds = array<i64: 256, 64>}, {pipeline_mode = #tpu.pipeline_mode<synchronous>, transform_indices = @transform_9, window_bounds = array<i64: 1, 16>}, {pipeline_mode = #tpu.pipeline_mode<synchronous>, transform_indices = @transform_10, window_bounds = array<i64: 1, 16>}, {pipeline_mode = #tpu.pipeline_mode<synchronous>, transform_indices = @transform_11, window_bounds = array<i64: 16, 64>}, {pipeline_mode = #tpu.pipeline_mode<synchronous>, transform_indices = @transform_12, window_bounds = array<i64: 1, 64>}, {pipeline_mode = #tpu.pipeline_mode<synchronous>, transform_indices = @transform_13, window_bounds = array<i64: 64, 16>}, {pipeline_mode = #tpu.pipeline_mode<synchronous>, transform_indices = @transform_14, window_bounds = array<i64: 1, 16>}, {transform_indices = @transform_15, window_bounds = array<i64: 1, 64, 16>}]} {
    %c0 = arith.constant 0 : index
    %c0_0 = arith.constant 0 : index
    %c0_1 = arith.constant 0 : index
    %0 = vector.load %arg1[%c0, %c0_0, %c0_1] : memref<1x64x16xf32, #tpu.memory_space<vmem>>, vector<1x64x16xf32>
    %1 = vector.shape_cast %0 : vector<1x64x16xf32> to vector<64x16xf32>
    %cst = arith.constant dense<0.000000e+00> : vector<64xf32>
    %2 = vector.multi_reduction <add>, %1, %cst [1] : vector<64x16xf32> to vector<64xf32>
    %3 = vector.shape_cast %2 : vector<64xf32> to vector<64x1xf32>
    %cst_2 = arith.constant 1.600000e+01 : f32
    %4 = vector.broadcast %cst_2 : f32 to vector<64x1xf32>
    %5 = arith.divf %3, %4 : vector<64x1xf32>
    %6 = vector.broadcast %5 : vector<64x1xf32> to vector<64x16xf32>
    %7 = arith.subf %1, %6 : vector<64x16xf32>
    %8 = vector.broadcast %5 : vector<64x1xf32> to vector<64x16xf32>
    %9 = arith.subf %1, %8 : vector<64x16xf32>
    %10 = arith.mulf %7, %9 : vector<64x16xf32>
    %cst_3 = arith.constant dense<0.000000e+00> : vector<64xf32>
    %11 = vector.multi_reduction <add>, %10, %cst_3 [1] : vector<64x16xf32> to vector<64xf32>
    %12 = vector.shape_cast %11 : vector<64xf32> to vector<64x1xf32>
    %cst_4 = arith.constant 1.600000e+01 : f32
    %13 = vector.broadcast %cst_4 : f32 to vector<64x1xf32>
    %14 = arith.divf %12, %13 : vector<64x1xf32>
    %15 = vector.broadcast %5 : vector<64x1xf32> to vector<64x16xf32>
    %16 = arith.subf %1, %15 : vector<64x16xf32>
    %cst_5 = arith.constant 9.99999974E-6 : f32
    %17 = vector.broadcast %cst_5 : f32 to vector<64x1xf32>
    %18 = arith.addf %14, %17 : vector<64x1xf32>
    %19 = math.rsqrt %18 : vector<64x1xf32>
    %20 = vector.broadcast %19 : vector<64x1xf32> to vector<64x16xf32>
    %21 = arith.mulf %16, %20 : vector<64x16xf32>
    %c0_6 = arith.constant 0 : index
    %c0_7 = arith.constant 0 : index
    %22 = vector.load %arg2[%c0_6, %c0_7] : memref<1x16xf32, #tpu.memory_space<vmem>>, vector<1x16xf32>
    %23 = vector.shape_cast %22 : vector<1x16xf32> to vector<16xf32>
    %24 = vector.shape_cast %23 : vector<16xf32> to vector<1x16xf32>
    %25 = vector.broadcast %24 : vector<1x16xf32> to vector<64x16xf32>
    %26 = arith.mulf %21, %25 : vector<64x16xf32>
    %c0_8 = arith.constant 0 : index
    %c0_9 = arith.constant 0 : index
    %27 = vector.load %arg3[%c0_8, %c0_9] : memref<1x16xf32, #tpu.memory_space<vmem>>, vector<1x16xf32>
    %28 = vector.shape_cast %27 : vector<1x16xf32> to vector<16xf32>
    %29 = vector.shape_cast %28 : vector<16xf32> to vector<1x16xf32>
    %30 = vector.broadcast %29 : vector<1x16xf32> to vector<64x16xf32>
    %31 = arith.addf %26, %30 : vector<64x16xf32>
    %c0_10 = arith.constant 0 : index
    %c0_11 = arith.constant 0 : index
    %32 = vector.load %arg4[%c0_10, %c0_11] : memref<16x48xf32, #tpu.memory_space<vmem>>, vector<16x48xf32>
    %cst_12 = arith.constant dense<0.000000e+00> : vector<64x48xf32>
    %33 = tpu.matmul %31, %32, %cst_12 {dimension_numbers = #tpu.dot_dimension_numbers<[1], [0], [0], [1], [0, 0, 1, 1], [], []>} : vector<64x16xf32>, vector<16x48xf32>, vector<64x48xf32> -> vector<64x48xf32>
    %c0_13 = arith.constant 0 : index
    %c0_14 = arith.constant 0 : index
    %34 = vector.load %arg5[%c0_13, %c0_14] : memref<1x48xf32, #tpu.memory_space<vmem>>, vector<1x48xf32>
    %35 = vector.shape_cast %34 : vector<1x48xf32> to vector<48xf32>
    %36 = vector.shape_cast %35 : vector<48xf32> to vector<1x48xf32>
    %37 = vector.broadcast %36 : vector<1x48xf32> to vector<64x48xf32>
    %38 = arith.addf %33, %37 : vector<64x48xf32>
    %39 = vector.extract_strided_slice %38 {offsets = [0, 0], sizes = [64, 16], strides = [1, 1]} : vector<64x48xf32> to vector<64x16xf32>
    %cst_15 = arith.constant 5.000000e-01 : f32
    %40 = vector.broadcast %cst_15 : f32 to vector<64x16xf32>
    %41 = arith.mulf %39, %40 : vector<64x16xf32>
    %42 = vector.extract_strided_slice %38 {offsets = [0, 16], sizes = [64, 16], strides = [1, 1]} : vector<64x48xf32> to vector<64x16xf32>
    %43 = vector.extract_strided_slice %38 {offsets = [0, 32], sizes = [64, 16], strides = [1, 1]} : vector<64x48xf32> to vector<64x16xf32>
    %c0_16 = arith.constant 0 : index
    %c0_17 = arith.constant 0 : index
    %44 = vector.load %arg8[%c0_16, %c0_17] : memref<256x16xf32, #tpu.memory_space<vmem>>, vector<256x16xf32>
    %45 = tpu.concatenate %41, %41, %41, %41 in 0 : vector<64x16xf32>, vector<64x16xf32>, vector<64x16xf32>, vector<64x16xf32> -> vector<256x16xf32>
    %46 = arith.mulf %45, %44 : vector<256x16xf32>
    %47 = tpu.transpose %42, [1, 0] : vector<64x16xf32> -> vector<16x64xf32>
    %cst_18 = arith.constant dense<0.000000e+00> : vector<256x64xf32>
    %48 = tpu.matmul %46, %47, %cst_18 {dimension_numbers = #tpu.dot_dimension_numbers<[1], [0], [0], [1], [0, 0, 1, 1], [], []>} : vector<256x16xf32>, vector<16x64xf32>, vector<256x64xf32> -> vector<256x64xf32>
    %c0_19 = arith.constant 0 : index
    %c0_20 = arith.constant 0 : index
    %49 = vector.load %arg9[%c0_19, %c0_20] : memref<256x64xf32, #tpu.memory_space<vmem>>, vector<256x64xf32>
    %50 = arith.addf %48, %49 : vector<256x64xf32>
    %cst_21 = arith.constant dense<0xFF800000> : vector<256xf32>
    %51 = vector.multi_reduction <maximumf>, %50, %cst_21 [1] : vector<256x64xf32> to vector<256xf32>
    %52 = vector.shape_cast %51 : vector<256xf32> to vector<256x1xf32>
    %53 = vector.broadcast %52 : vector<256x1xf32> to vector<256x64xf32>
    %54 = arith.subf %50, %53 : vector<256x64xf32>
    %55 = math.exp %54 : vector<256x64xf32>
    %cst_22 = arith.constant dense<0.000000e+00> : vector<256xf32>
    %56 = vector.multi_reduction <add>, %55, %cst_22 [1] : vector<256x64xf32> to vector<256xf32>
    %57 = vector.shape_cast %56 : vector<256xf32> to vector<256x1xf32>
    %58 = tpu.reciprocal %57 {approx = true} : vector<256x1xf32> -> vector<256x1xf32>
    %59 = vector.broadcast %58 : vector<256x1xf32> to vector<256x64xf32>
    %60 = arith.mulf %55, %59 : vector<256x64xf32>
    %cst_23 = arith.constant dense<0.000000e+00> : vector<256x16xf32>
    %61 = tpu.matmul %60, %43, %cst_23 {dimension_numbers = #tpu.dot_dimension_numbers<[1], [0], [0], [1], [0, 0, 1, 1], [], []>} : vector<256x64xf32>, vector<64x16xf32>, vector<256x16xf32> -> vector<256x16xf32>
    %62 = arith.mulf %61, %44 : vector<256x16xf32>
    %63 = vector.shape_cast %62 : vector<256x16xf32> to vector<4x64x16xf32>
    %cst_24 = arith.constant dense<0.000000e+00> : vector<64x16xf32>
    %64 = vector.multi_reduction <add>, %63, %cst_24 [0] : vector<4x64x16xf32> to vector<64x16xf32>
    %c0_25 = arith.constant 0 : index
    %c0_26 = arith.constant 0 : index
    %65 = vector.load %arg6[%c0_25, %c0_26] : memref<16x16xf32, #tpu.memory_space<vmem>>, vector<16x16xf32>
    %cst_27 = arith.constant dense<0.000000e+00> : vector<64x16xf32>
    %66 = tpu.matmul %64, %65, %cst_27 {dimension_numbers = #tpu.dot_dimension_numbers<[1], [0], [0], [1], [0, 0, 1, 1], [], []>} : vector<64x16xf32>, vector<16x16xf32>, vector<64x16xf32> -> vector<64x16xf32>
    %c0_28 = arith.constant 0 : index
    %c0_29 = arith.constant 0 : index
    %67 = vector.load %arg7[%c0_28, %c0_29] : memref<1x16xf32, #tpu.memory_space<vmem>>, vector<1x16xf32>
    %68 = vector.shape_cast %67 : vector<1x16xf32> to vector<16xf32>
    %69 = vector.shape_cast %68 : vector<16xf32> to vector<1x16xf32>
    %70 = vector.broadcast %69 : vector<1x16xf32> to vector<64x16xf32>
    %71 = arith.addf %66, %70 : vector<64x16xf32>
    %72 = arith.addf %1, %71 : vector<64x16xf32>
    %cst_30 = arith.constant dense<0.000000e+00> : vector<64xf32>
    %73 = vector.multi_reduction <add>, %72, %cst_30 [1] : vector<64x16xf32> to vector<64xf32>
    %74 = vector.shape_cast %73 : vector<64xf32> to vector<64x1xf32>
    %cst_31 = arith.constant 1.600000e+01 : f32
    %75 = vector.broadcast %cst_31 : f32 to vector<64x1xf32>
    %76 = arith.divf %74, %75 : vector<64x1xf32>
    %77 = vector.broadcast %76 : vector<64x1xf32> to vector<64x16xf32>
    %78 = arith.subf %72, %77 : vector<64x16xf32>
    %79 = vector.broadcast %76 : vector<64x1xf32> to vector<64x16xf32>
    %80 = arith.subf %72, %79 : vector<64x16xf32>
    %81 = arith.mulf %78, %80 : vector<64x16xf32>
    %cst_32 = arith.constant dense<0.000000e+00> : vector<64xf32>
    %82 = vector.multi_reduction <add>, %81, %cst_32 [1] : vector<64x16xf32> to vector<64xf32>
    %83 = vector.shape_cast %82 : vector<64xf32> to vector<64x1xf32>
    %cst_33 = arith.constant 1.600000e+01 : f32
    %84 = vector.broadcast %cst_33 : f32 to vector<64x1xf32>
    %85 = arith.divf %83, %84 : vector<64x1xf32>
    %86 = vector.broadcast %76 : vector<64x1xf32> to vector<64x16xf32>
    %87 = arith.subf %72, %86 : vector<64x16xf32>
    %cst_34 = arith.constant 9.99999974E-6 : f32
    %88 = vector.broadcast %cst_34 : f32 to vector<64x1xf32>
    %89 = arith.addf %85, %88 : vector<64x1xf32>
    %90 = math.rsqrt %89 : vector<64x1xf32>
    %91 = vector.broadcast %90 : vector<64x1xf32> to vector<64x16xf32>
    %92 = arith.mulf %87, %91 : vector<64x16xf32>
    %c0_35 = arith.constant 0 : index
    %c0_36 = arith.constant 0 : index
    %93 = vector.load %arg10[%c0_35, %c0_36] : memref<1x16xf32, #tpu.memory_space<vmem>>, vector<1x16xf32>
    %94 = vector.shape_cast %93 : vector<1x16xf32> to vector<16xf32>
    %95 = vector.shape_cast %94 : vector<16xf32> to vector<1x16xf32>
    %96 = vector.broadcast %95 : vector<1x16xf32> to vector<64x16xf32>
    %97 = arith.mulf %92, %96 : vector<64x16xf32>
    %c0_37 = arith.constant 0 : index
    %c0_38 = arith.constant 0 : index
    %98 = vector.load %arg11[%c0_37, %c0_38] : memref<1x16xf32, #tpu.memory_space<vmem>>, vector<1x16xf32>
    %99 = vector.shape_cast %98 : vector<1x16xf32> to vector<16xf32>
    %100 = vector.shape_cast %99 : vector<16xf32> to vector<1x16xf32>
    %101 = vector.broadcast %100 : vector<1x16xf32> to vector<64x16xf32>
    %102 = arith.addf %97, %101 : vector<64x16xf32>
    %c0_39 = arith.constant 0 : index
    %c0_40 = arith.constant 0 : index
    %103 = vector.load %arg12[%c0_39, %c0_40] : memref<16x64xf32, #tpu.memory_space<vmem>>, vector<16x64xf32>
    %cst_41 = arith.constant dense<0.000000e+00> : vector<64x64xf32>
    %104 = tpu.matmul %102, %103, %cst_41 {dimension_numbers = #tpu.dot_dimension_numbers<[1], [0], [0], [1], [0, 0, 1, 1], [], []>} : vector<64x16xf32>, vector<16x64xf32>, vector<64x64xf32> -> vector<64x64xf32>
    %c0_42 = arith.constant 0 : index
    %c0_43 = arith.constant 0 : index
    %105 = vector.load %arg13[%c0_42, %c0_43] : memref<1x64xf32, #tpu.memory_space<vmem>>, vector<1x64xf32>
    %106 = vector.shape_cast %105 : vector<1x64xf32> to vector<64xf32>
    %107 = vector.shape_cast %106 : vector<64xf32> to vector<1x64xf32>
    %108 = vector.broadcast %107 : vector<1x64xf32> to vector<64x64xf32>
    %109 = arith.addf %104, %108 : vector<64x64xf32>
    %cst_44 = arith.constant 5.000000e-01 : f32
    %110 = vector.broadcast %cst_44 : f32 to vector<64x64xf32>
    %111 = arith.mulf %110, %109 : vector<64x64xf32>
    %cst_45 = arith.constant 0.707106769 : f32
    %112 = vector.broadcast %cst_45 : f32 to vector<64x64xf32>
    %113 = arith.mulf %109, %112 : vector<64x64xf32>
    %114 = math.erf %113 : vector<64x64xf32>
    %cst_46 = arith.constant 1.000000e+00 : f32
    %115 = vector.broadcast %cst_46 : f32 to vector<64x64xf32>
    %116 = arith.addf %115, %114 : vector<64x64xf32>
    %117 = arith.mulf %111, %116 : vector<64x64xf32>
    %c0_47 = arith.constant 0 : index
    %c0_48 = arith.constant 0 : index
    %118 = vector.load %arg14[%c0_47, %c0_48] : memref<64x16xf32, #tpu.memory_space<vmem>>, vector<64x16xf32>
    %cst_49 = arith.constant dense<0.000000e+00> : vector<64x16xf32>
    %119 = tpu.matmul %117, %118, %cst_49 {dimension_numbers = #tpu.dot_dimension_numbers<[1], [0], [0], [1], [0, 0, 1, 1], [], []>} : vector<64x64xf32>, vector<64x16xf32>, vector<64x16xf32> -> vector<64x16xf32>
    %120 = arith.addf %72, %119 : vector<64x16xf32>
    %c0_50 = arith.constant 0 : index
    %c0_51 = arith.constant 0 : index
    %121 = vector.load %arg15[%c0_50, %c0_51] : memref<1x16xf32, #tpu.memory_space<vmem>>, vector<1x16xf32>
    %122 = vector.shape_cast %121 : vector<1x16xf32> to vector<16xf32>
    %123 = vector.shape_cast %122 : vector<16xf32> to vector<1x16xf32>
    %124 = vector.broadcast %123 : vector<1x16xf32> to vector<64x16xf32>
    %125 = arith.addf %120, %124 : vector<64x16xf32>
    %c0_52 = arith.constant 0 : index
    %c0_53 = arith.constant 0 : index
    %c0_54 = arith.constant 0 : index
    %126 = vector.load %arg16[%c0_52, %c0_53, %c0_54] : memref<1x64x16xf32, #tpu.memory_space<vmem>>, vector<1x64x16xf32>
    %127 = vector.shape_cast %126 : vector<1x64x16xf32> to vector<64x16xf32>
    %128 = vector.shape_cast %125 : vector<64x16xf32> to vector<1x64x16xf32>
    tpu.vector_store %arg16[%c0_52, %c0_53, %c0_54], %128 {strides = array<i32>} : memref<1x64x16xf32, #tpu.memory_space<vmem>>, vector<1x64x16xf32>,
    return
  }
  func.func @transform_0(%arg0: i32) -> (i32, i32, i32) {
    %c0_i32 = arith.constant 0 : i32
    %c0_i32_0 = arith.constant 0 : i32
    %c0_i32_1 = arith.constant 0 : i32
    return %arg0, %c0_i32, %c0_i32_0 : i32, i32, i32
  }
  func.func @transform_1(%arg0: i32) -> (i32, i32) {
    %c0_i32 = arith.constant 0 : i32
    %c0_i32_0 = arith.constant 0 : i32
    %c0_i32_1 = arith.constant 0 : i32
    return %c0_i32, %c0_i32_0 : i32, i32
  }
  func.func @transform_2(%arg0: i32) -> (i32, i32) {
    %c0_i32 = arith.constant 0 : i32
    %c0_i32_0 = arith.constant 0 : i32
    %c0_i32_1 = arith.constant 0 : i32
    return %c0_i32, %c0_i32_0 : i32, i32
  }
  func.func @transform_3(%arg0: i32) -> (i32, i32) {
    %c0_i32 = arith.constant 0 : i32
    %c0_i32_0 = arith.constant 0 : i32
    %c0_i32_1 = arith.constant 0 : i32
    return %c0_i32, %c0_i32_0 : i32, i32
  }
  func.func @transform_4(%arg0: i32) -> (i32, i32) {
    %c0_i32 = arith.constant 0 : i32
    %c0_i32_0 = arith.constant 0 : i32
    %c0_i32_1 = arith.constant 0 : i32
    return %c0_i32, %c0_i32_0 : i32, i32
  }
  func.func @transform_5(%arg0: i32) -> (i32, i32) {
    %c0_i32 = arith.constant 0 : i32
    %c0_i32_0 = arith.constant 0 : i32
    %c0_i32_1 = arith.constant 0 : i32
    return %c0_i32, %c0_i32_0 : i32, i32
  }
  func.func @transform_6(%arg0: i32) -> (i32, i32) {
    %c0_i32 = arith.constant 0 : i32
    %c0_i32_0 = arith.constant 0 : i32
    %c0_i32_1 = arith.constant 0 : i32
    return %c0_i32, %c0_i32_0 : i32, i32
  }
  func.func @transform_7(%arg0: i32) -> (i32, i32) {
    %c0_i32 = arith.constant 0 : i32
    %c0_i32_0 = arith.constant 0 : i32
    %c0_i32_1 = arith.constant 0 : i32
    return %c0_i32, %c0_i32_0 : i32, i32
  }
  func.func @transform_8(%arg0: i32) -> (i32, i32) {
    %c0_i32 = arith.constant 0 : i32
    %c0_i32_0 = arith.constant 0 : i32
    %c0_i32_1 = arith.constant 0 : i32
    return %c0_i32, %c0_i32_0 : i32, i32
  }
  func.func @transform_9(%arg0: i32) -> (i32, i32) {
    %c0_i32 = arith.constant 0 : i32
    %c0_i32_0 = arith.constant 0 : i32
    %c0_i32_1 = arith.constant 0 : i32
    return %c0_i32, %c0_i32_0 : i32, i32
  }
  func.func @transform_10(%arg0: i32) -> (i32, i32) {
    %c0_i32 = arith.constant 0 : i32
    %c0_i32_0 = arith.constant 0 : i32
    %c0_i32_1 = arith.constant 0 : i32
    return %c0_i32, %c0_i32_0 : i32, i32
  }
  func.func @transform_11(%arg0: i32) -> (i32, i32) {
    %c0_i32 = arith.constant 0 : i32
    %c0_i32_0 = arith.constant 0 : i32
    %c0_i32_1 = arith.constant 0 : i32
    return %c0_i32, %c0_i32_0 : i32, i32
  }
  func.func @transform_12(%arg0: i32) -> (i32, i32) {
    %c0_i32 = arith.constant 0 : i32
    %c0_i32_0 = arith.constant 0 : i32
    %c0_i32_1 = arith.constant 0 : i32
    return %c0_i32, %c0_i32_0 : i32, i32
  }
  func.func @transform_13(%arg0: i32) -> (i32, i32) {
    %c0_i32 = arith.constant 0 : i32
    %c0_i32_0 = arith.constant 0 : i32
    %c0_i32_1 = arith.constant 0 : i32
    return %c0_i32, %c0_i32_0 : i32, i32
  }
  func.func @transform_14(%arg0: i32) -> (i32, i32) {
    %c0_i32 = arith.constant 0 : i32
    %c0_i32_0 = arith.constant 0 : i32
    %c0_i32_1 = arith.constant 0 : i32
    return %c0_i32, %c0_i32_0 : i32, i32
  }
  func.func @transform_15(%arg0: i32) -> (i32, i32, i32) {
    %c0_i32 = arith.constant 0 : i32
    %c0_i32_0 = arith.constant 0 : i32
    %c0_i32_1 = arith.constant 0 : i32
    return %arg0, %c0_i32, %c0_i32_0 : i32, i32, i32
  }
}

</mosaic_0001>

<llo_original>
// kernel: swin_block_forward.1
$region0: #{swin_block_forward.1}
  #allocation0 [shape = 'u32[]', space=smem, size = 0x4, offset = 0x4, fixed_abs, tag = 'smem constant byte address 0x4 - core index']
  #allocation1 [shape = 'u32[144,128]{1,0:T(1,128)}', space=vmem, size = 0x12000, scoped, tag = 'internal scratch']
  %s0 = inlined_call_operand.vmem [shape: f32[2,64,16], index: 0, kind: input, shape index: {}]
  %s1 = inlined_call_operand.vmem [shape: f32[1,16], index: 1, kind: input, shape index: {}]
  %s2 = inlined_call_operand.vmem [shape: f32[1,16], index: 2, kind: input, shape index: {}]
  %s3 = inlined_call_operand.vmem [shape: f32[16,48], index: 3, kind: input, shape index: {}]
  %s4 = inlined_call_operand.vmem [shape: f32[1,48], index: 4, kind: input, shape index: {}]
  %s5 = inlined_call_operand.vmem [shape: f32[16,16], index: 5, kind: input, shape index: {}]
  %s6 = inlined_call_operand.vmem [shape: f32[1,16], index: 6, kind: input, shape index: {}]
  %s7 = inlined_call_operand.vmem [shape: f32[256,16], index: 7, kind: input, shape index: {}]
  %s8 = inlined_call_operand.vmem [shape: f32[256,64], index: 8, kind: input, shape index: {}]
  %s9 = inlined_call_operand.vmem [shape: f32[1,16], index: 9, kind: input, shape index: {}]
  %s10 = inlined_call_operand.vmem [shape: f32[1,16], index: 10, kind: input, shape index: {}]
  %s11 = inlined_call_operand.vmem [shape: f32[16,64], index: 11, kind: input, shape index: {}]
  %s12 = inlined_call_operand.vmem [shape: f32[1,64], index: 12, kind: input, shape index: {}]
  %s13 = inlined_call_operand.vmem [shape: f32[64,16], index: 13, kind: input, shape index: {}]
  %s14 = inlined_call_operand.vmem [shape: f32[1,16], index: 14, kind: input, shape index: {}]
  %s15 = inlined_call_operand.vmem [shape: f32[2,64,16], index: 15, kind: output, shape index: {}]
  %s16 = sld [smem:[#allocation0]]
  $region93: #{swin_block_forward.1} parent=0
    _
  %s18 = ssub.s32 1, %s16
  %s19 = scalar_select 0, %s18, %s16
  loop: start=0, step=1, limit=4
  $region2: #{swin_block_forward.1} parent=0 // loop_pre_header
    _
  $region3: #{swin_block_forward.1} parent=0 // loop_header
    %s21 = sphi 0, %s25
    %p22 = scmp.ge.s32.totalorder %s21, 4
    %s31 = sphi 0, %s33
    %s34 = sphi 0, %s31
    %s35 = sphi 0, %s34
    %s51 = sphi 0, %s35
    %s55 = sphi 0, %s55
    %s57 = sphi 0, %s55
    %s58 = sphi 0, %s57
    %s72 = sphi 0, %s58
    %s76 = sphi 0, %s76
    %s78 = sphi 0, %s76
    %s79 = sphi 0, %s78
    %s93 = sphi 0, %s79
    %s97 = sphi 0, %s97
    %s99 = sphi 0, %s97
    %s100 = sphi 0, %s99
    %s114 = sphi 0, %s100
    %s118 = sphi 0, %s118
    %s120 = sphi 0, %s118
    %s121 = sphi 0, %s120
    %s135 = sphi 0, %s121
    %s139 = sphi 0, %s139
    %s141 = sphi 0, %s139
    %s142 = sphi 0, %s141
    %s156 = sphi 0, %s142
    %s160 = sphi 0, %s160
    %s162 = sphi 0, %s160
    %s163 = sphi 0, %s162
    %s177 = sphi 0, %s163
    %s181 = sphi 0, %s181
    %s183 = sphi 0, %s181
    %s184 = sphi 0, %s183
    %s198 = sphi 0, %s184
    %s202 = sphi 0, %s202
    %s204 = sphi 0, %s202
    %s205 = sphi 0, %s204
    %s219 = sphi 0, %s205
    %s223 = sphi 0, %s223
    %s225 = sphi 0, %s223
    %s226 = sphi 0, %s225
    %s240 = sphi 0, %s226
    %s244 = sphi 0, %s244
    %s246 = sphi 0, %s244
    %s247 = sphi 0, %s246
    %s261 = sphi 0, %s247
    %s265 = sphi 0, %s265
    %s267 = sphi 0, %s265
    %s268 = sphi 0, %s267
    %s282 = sphi 0, %s268
    %s286 = sphi 0, %s286
    %s288 = sphi 0, %s286
    %s289 = sphi 0, %s288
    %s303 = sphi 0, %s289
    %s307 = sphi 0, %s307
    %s309 = sphi 0, %s307
    %s310 = sphi 0, %s309
    %s324 = sphi 0, %s310
    %s328 = sphi 0, %s328
    %s330 = sphi 0, %s328
    %s331 = sphi 0, %s330
    %s345 = sphi 0, %s331
    %s351 = sphi 0, %s353
    %s354 = sphi 0, %s351
    %s355 = sphi 0, %s354
    %s371 = sphi 0, %s355
  $region4: #{swin_block_forward.1} parent=0 // loop_header_branch
    %24 = sbr.rel (%p22) target = $region8
  $region5: #{swin_block_forward.1} parent=0 // loop_body
    %s26 = ssub.s32 %s21, 1
    %s27 = ssub.s32 %s21, 2
    %s28 = sadd.s32 %s21, 1
    %s29 = ssub.s32 %s21, %s28
    %p30 = scmp.eq.s32.totalorder %s29, 0
    %s32 = sadd.s32 %s31, 1
    %s33 = scalar_select %p30, %s31, %s32
    %p36 = pneg %p30
    %p37 = scmp.eq.s32.totalorder %s21, 1
    %p38 = por %p36, %p37
    %p39 = scmp.ne.s32.totalorder %s31, %s34
    %p40 = scmp.eq.s32.totalorder %s21, 0
    %p41 = por %p39, %p40
    %p42 = scmp.ne.s32.totalorder %s31, %s34
    %p43 = scmp.eq.s32.totalorder %s26, 1
    %p44 = por %p42, %p43
    %p45 = scmp.ne.s32.totalorder %s34, %s35
    %p46 = scmp.eq.s32.totalorder %s26, 0
    %p47 = por %p45, %p46
    %p48 = scmp.ne.s32.totalorder %s34, %s35
    %p49 = scmp.eq.s32.totalorder %s27, 1
    %p50 = por %p48, %p49
    %p52 = scmp.ne.s32.totalorder %s35, %s51
    %p53 = scmp.eq.s32.totalorder %s27, 0
    %p54 = por %p52, %p53
    %s56 = sadd.s32 %s55, 1
    %p59 = scmp.eq.s32.totalorder %s21, 1
    %p60 = scmp.ne.s32.totalorder %s55, %s57
    %p61 = scmp.eq.s32.totalorder %s21, 0
    %p62 = por %p60, %p61
    %p63 = scmp.ne.s32.totalorder %s55, %s57
    %p64 = scmp.eq.s32.totalorder %s26, 1
    %p65 = por %p63, %p64
    %p66 = scmp.ne.s32.totalorder %s57, %s58
    %p67 = scmp.eq.s32.totalorder %s26, 0
    %p68 = por %p66, %p67
    %p69 = scmp.ne.s32.totalorder %s57, %s58
    %p70 = scmp.eq.s32.totalorder %s27, 1
    %p71 = por %p69, %p70
    %p73 = scmp.ne.s32.totalorder %s58, %s72
    %p74 = scmp.eq.s32.totalorder %s27, 0
    %p75 = por %p73, %p74
    %s77 = sadd.s32 %s76, 1
    %p80 = scmp.eq.s32.totalorder %s21, 1
    %p81 = scmp.ne.s32.totalorder %s76, %s78
    %p82 = scmp.eq.s32.totalorder %s21, 0
    %p83 = por %p81, %p82
    %p84 = scmp.ne.s32.totalorder %s76, %s78
    %p85 = scmp.eq.s32.totalorder %s26, 1
    %p86 = por %p84, %p85
    %p87 = scmp.ne.s32.totalorder %s78, %s79
    %p88 = scmp.eq.s32.totalorder %s26, 0
    %p89 = por %p87, %p88
    %p90 = scmp.ne.s32.totalorder %s78, %s79
    %p91 = scmp.eq.s32.totalorder %s27, 1
    %p92 = por %p90, %p91
    %p94 = scmp.ne.s32.totalorder %s79, %s93
    %p95 = scmp.eq.s32.totalorder %s27, 0
    %p96 = por %p94, %p95
    %s98 = sadd.s32 %s97, 1
    %p101 = scmp.eq.s32.totalorder %s21, 1
    %p102 = scmp.ne.s32.totalorder %s97, %s99
    %p103 = scmp.eq.s32.totalorder %s21, 0
    %p104 = por %p102, %p103
    %p105 = scmp.ne.s32.totalorder %s97, %s99
    %p106 = scmp.eq.s32.totalorder %s26, 1
    %p107 = por %p105, %p106
    %p108 = scmp.ne.s32.totalorder %s99, %s100
    %p109 = scmp.eq.s32.totalorder %s26, 0
    %p110 = por %p108, %p109
    %p111 = scmp.ne.s32.totalorder %s99, %s100
    %p112 = scmp.eq.s32.totalorder %s27, 1
    %p113 = por %p111, %p112
    %p115 = scmp.ne.s32.totalorder %s100, %s114
    %p116 = scmp.eq.s32.totalorder %s27, 0
    %p117 = por %p115, %p116
    %s119 = sadd.s32 %s118, 1
    %p122 = scmp.eq.s32.totalorder %s21, 1
    %p123 = scmp.ne.s32.totalorder %s118, %s120
    %p124 = scmp.eq.s32.totalorder %s21, 0
    %p125 = por %p123, %p124
    %p126 = scmp.ne.s32.totalorder %s118, %s120
    %p127 = scmp.eq.s32.totalorder %s26, 1
    %p128 = por %p126, %p127
    %p129 = scmp.ne.s32.totalorder %s120, %s121
    %p130 = scmp.eq.s32.totalorder %s26, 0
    %p131 = por %p129, %p130
    %p132 = scmp.ne.s32.totalorder %s120, %s121
    %p133 = scmp.eq.s32.totalorder %s27, 1
    %p134 = por %p132, %p133
    %p136 = scmp.ne.s32.totalorder %s121, %s135
    %p137 = scmp.eq.s32.totalorder %s27, 0
    %p138 = por %p136, %p137
    %s140 = sadd.s32 %s139, 1
    %p143 = scmp.eq.s32.totalorder %s21, 1
    %p144 = scmp.ne.s32.totalorder %s139, %s141
    %p145 = scmp.eq.s32.totalorder %s21, 0
    %p146 = por %p144, %p145
    %p147 = scmp.ne.s32.totalorder %s139, %s141
    %p148 = scmp.eq.s32.totalorder %s26, 1
    %p149 = por %p147, %p148
    %p150 = scmp.ne.s32.totalorder %s141, %s142
    %p151 = scmp.eq.s32.totalorder %s26, 0
    %p152 = por %p150, %p151
    %p153 = scmp.ne.s32.totalorder %s141, %s142
    %p154 = scmp.eq.s32.totalorder %s27, 1
    %p155 = por %p153, %p154
    %p157 = scmp.ne.s32.totalorder %s142, %s156
    %p158 = scmp.eq.s32.totalorder %s27, 0
    %p159 = por %p157, %p158
    %s161 = sadd.s32 %s160, 1
    %p164 = scmp.eq.s32.totalorder %s21, 1
    %p165 = scmp.ne.s32.totalorder %s160, %s162
    %p166 = scmp.eq.s32.totalorder %s21, 0
    %p167 = por %p165, %p166
    %p168 = scmp.ne.s32.totalorder %s160, %s162
    %p169 = scmp.eq.s32.totalorder %s26, 1
    %p170 = por %p168, %p169
    %p171 = scmp.ne.s32.totalorder %s162, %s163
    %p172 = scmp.eq.s32.totalorder %s26, 0
    %p173 = por %p171, %p172
    %p174 = scmp.ne.s32.totalorder %s162, %s163
    %p175 = scmp.eq.s32.totalorder %s27, 1
    %p176 = por %p174, %p175
    %p178 = scmp.ne.s32.totalorder %s163, %s177
    %p179 = scmp.eq.s32.totalorder %s27, 0
    %p180 = por %p178, %p179
    %s182 = sadd.s32 %s181, 1
    %p185 = scmp.eq.s32.totalorder %s21, 1
    %p186 = scmp.ne.s32.totalorder %s181, %s183
    %p187 = scmp.eq.s32.totalorder %s21, 0
    %p188 = por %p186, %p187
    %p189 = scmp.ne.s32.totalorder %s181, %s183
    %p190 = scmp.eq.s32.totalorder %s26, 1
    %p191 = por %p189, %p190
    %p192 = scmp.ne.s32.totalorder %s183, %s184
    %p193 = scmp.eq.s32.totalorder %s26, 0
    %p194 = por %p192, %p193
    %p195 = scmp.ne.s32.totalorder %s183, %s184
    %p196 = scmp.eq.s32.totalorder %s27, 1
    %p197 = por %p195, %p196
    %p199 = scmp.ne.s32.totalorder %s184, %s198
    %p200 = scmp.eq.s32.totalorder %s27, 0
    %p201 = por %p199, %p200
    %s203 = sadd.s32 %s202, 1
    %p206 = scmp.eq.s32.totalorder %s21, 1
    %p207 = scmp.ne.s32.totalorder %s202, %s204
    %p208 = scmp.eq.s32.totalorder %s21, 0
    %p209 = por %p207, %p208
    %p210 = scmp.ne.s32.totalorder %s202, %s204
    %p211 = scmp.eq.s32.totalorder %s26, 1
    %p212 = por %p210, %p211
    %p213 = scmp.ne.s32.totalorder %s204, %s205
    %p214 = scmp.eq.s32.totalorder %s26, 0
    %p215 = por %p213, %p214
    %p216 = scmp.ne.s32.totalorder %s204, %s205
    %p217 = scmp.eq.s32.totalorder %s27, 1
    %p218 = por %p216, %p217
    %p220 = scmp.ne.s32.totalorder %s205, %s219
    %p221 = scmp.eq.s32.totalorder %s27, 0
    %p222 = por %p220, %p221
    %s224 = sadd.s32 %s223, 1
    %p227 = scmp.eq.s32.totalorder %s21, 1
    %p228 = scmp.ne.s32.totalorder %s223, %s225
    %p229 = scmp.eq.s32.totalorder %s21, 0
    %p230 = por %p228, %p229
    %p231 = scmp.ne.s32.totalorder %s223, %s225
    %p232 = scmp.eq.s32.totalorder %s26, 1
    %p233 = por %p231, %p232
    %p234 = scmp.ne.s32.totalorder %s225, %s226
    %p235 = scmp.eq.s32.totalorder %s26, 0
    %p236 = por %p234, %p235
    %p237 = scmp.ne.s32.totalorder %s225, %s226
    %p238 = scmp.eq.s32.totalorder %s27, 1
    %p239 = por %p237, %p238
    %p241 = scmp.ne.s32.totalorder %s226, %s240
    %p242 = scmp.eq.s32.totalorder %s27, 0
    %p243 = por %p241, %p242
    %s245 = sadd.s32 %s244, 1
    %p248 = scmp.eq.s32.totalorder %s21, 1
    %p249 = scmp.ne.s32.totalorder %s244, %s246
    %p250 = scmp.eq.s32.totalorder %s21, 0
    %p251 = por %p249, %p250
    %p252 = scmp.ne.s32.totalorder %s244, %s246
    %p253 = scmp.eq.s32.totalorder %s26, 1
    %p254 = por %p252, %p253
    %p255 = scmp.ne.s32.totalorder %s246, %s247
    %p256 = scmp.eq.s32.totalorder %s26, 0
    %p257 = por %p255, %p256
    %p258 = scmp.ne.s32.totalorder %s246, %s247
    %p259 = scmp.eq.s32.totalorder %s27, 1
    %p260 = por %p258, %p259
    %p262 = scmp.ne.s32.totalorder %s247, %s261
    %p263 = scmp.eq.s32.totalorder %s27, 0
    %p264 = por %p262, %p263
    %s266 = sadd.s32 %s265, 1
    %p269 = scmp.eq.s32.totalorder %s21, 1
    %p270 = scmp.ne.s32.totalorder %s265, %s267
    %p271 = scmp.eq.s32.totalorder %s21, 0
    %p272 = por %p270, %p271
    %p273 = scmp.ne.s32.totalorder %s265, %s267
    %p274 = scmp.eq.s32.totalorder %s26, 1
    %p275 = por %p273, %p274
    %p276 = scmp.ne.s32.totalorder %s267, %s268
    %p277 = scmp.eq.s32.totalorder %s26, 0
    %p278 = por %p276, %p277
    %p279 = scmp.ne.s32.totalorder %s267, %s268
    %p280 = scmp.eq.s32.totalorder %s27, 1
    %p281 = por %p279, %p280
    %p283 = scmp.ne.s32.totalorder %s268, %s282
    %p284 = scmp.eq.s32.totalorder %s27, 0
    %p285 = por %p283, %p284
    %s287 = sadd.s32 %s286, 1
    %p290 = scmp.eq.s32.totalorder %s21, 1
    %p291 = scmp.ne.s32.totalorder %s286, %s288
    %p292 = scmp.eq.s32.totalorder %s21, 0
    %p293 = por %p291, %p292
    %p294 = scmp.ne.s32.totalorder %s286, %s288
    %p295 = scmp.eq.s32.totalorder %s26, 1
    %p296 = por %p294, %p295
    %p297 = scmp.ne.s32.totalorder %s288, %s289
    %p298 = scmp.eq.s32.totalorder %s26, 0
    %p299 = por %p297, %p298
    %p300 = scmp.ne.s32.totalorder %s288, %s289
    %p301 = scmp.eq.s32.totalorder %s27, 1
    %p302 = por %p300, %p301
    %p304 = scmp.ne.s32.totalorder %s289, %s303
    %p305 = scmp.eq.s32.totalorder %s27, 0
    %p306 = por %p304, %p305
    %s308 = sadd.s32 %s307, 1
    %p311 = scmp.eq.s32.totalorder %s21, 1
    %p312 = scmp.ne.s32.totalorder %s307, %s309
    %p313 = scmp.eq.s32.totalorder %s21, 0
    %p314 = por %p312, %p313
    %p315 = scmp.ne.s32.totalorder %s307, %s309
    %p316 = scmp.eq.s32.totalorder %s26, 1
    %p317 = por %p315, %p316
    %p318 = scmp.ne.s32.totalorder %s309, %s310
    %p319 = scmp.eq.s32.totalorder %s26, 0
    %p320 = por %p318, %p319
    %p321 = scmp.ne.s32.totalorder %s309, %s310
    %p322 = scmp.eq.s32.totalorder %s27, 1
    %p323 = por %p321, %p322
    %p325 = scmp.ne.s32.totalorder %s310, %s324
    %p326 = scmp.eq.s32.totalorder %s27, 0
    %p327 = por %p325, %p326
    %s329 = sadd.s32 %s328, 1
    %p332 = scmp.eq.s32.totalorder %s21, 1
    %p333 = scmp.ne.s32.totalorder %s328, %s330
    %p334 = scmp.eq.s32.totalorder %s21, 0
    %p335 = por %p333, %p334
    %p336 = scmp.ne.s32.totalorder %s328, %s330
    %p337 = scmp.eq.s32.totalorder %s26, 1
    %p338 = por %p336, %p337
    %p339 = scmp.ne.s32.totalorder %s330, %s331
    %p340 = scmp.eq.s32.totalorder %s26, 0
    %p341 = por %p339, %p340
    %p342 = scmp.ne.s32.totalorder %s330, %s331
    %p343 = scmp.eq.s32.totalorder %s27, 1
    %p344 = por %p342, %p343
    %p346 = scmp.ne.s32.totalorder %s331, %s345
    %p347 = scmp.eq.s32.totalorder %s27, 0
    %p348 = por %p346, %p347
    %s349 = ssub.s32 %s21, %s28
    %p350 = scmp.eq.s32.totalorder %s349, 0
    %s352 = sadd.s32 %s351, 1
    %s353 = scalar_select %p350, %s351, %s352
    %p356 = pneg %p350
    %p357 = scmp.eq.s32.totalorder %s21, 1
    %p358 = por %p356, %p357
    %p359 = scmp.ne.s32.totalorder %s351, %s354
    %p360 = scmp.eq.s32.totalorder %s21, 0
    %p361 = por %p359, %p360
    %p362 = scmp.ne.s32.totalorder %s351, %s354
    %p363 = scmp.eq.s32.totalorder %s26, 1
    %p364 = por %p362, %p363
    %p365 = scmp.ne.s32.totalorder %s354, %s355
    %p366 = scmp.eq.s32.totalorder %s26, 0
    %p367 = por %p365, %p366
    %p368 = scmp.ne.s32.totalorder %s354, %s355
    %p369 = scmp.eq.s32.totalorder %s27, 1
    %p370 = por %p368, %p369
    %p372 = scmp.ne.s32.totalorder %s355, %s371
    %p373 = scmp.eq.s32.totalorder %s27, 0
    %p374 = por %p372, %p373
    %p375 = scmp.le.s32.totalorder 1, %s21
    %p376 = scmp.lt.s32.totalorder %s21, 3
    %p377 = pnand %p375, %p376
    %p378 = pneg %p377
    // Predicated region
    $region9: #{swin_block_forward.1} parent=5 // pred_check
      _
    $region10: #{swin_block_forward.1} parent=5 // pred_check_branch
      %380 = sbr.rel (%p377) target = $region12
    $region11: #{swin_block_forward.1} parent=5 // pred_region
      %s381 = ssub.s32 %s21, 1
      // Predicated region
      $region13: #{swin_block_forward.1} parent=11 // pred_check
        %p382 = pneg %p68
      $region14: #{swin_block_forward.1} parent=11 // pred_check_branch
        %384 = sbr.rel (%p382) target = $region16
      $region15: #{swin_block_forward.1} parent=11 // pred_region
        _
      $region16: #{swin_block_forward.1} parent=11 // pred_fallthru
        _
      // Predicated region
      $region17: #{swin_block_forward.1} parent=11 // pred_check
        %p385 = pneg %p89
      $region18: #{swin_block_forward.1} parent=11 // pred_check_branch
        %387 = sbr.rel (%p385) target = $region20
      $region19: #{swin_block_forward.1} parent=11 // pred_region
        _
      $region20: #{swin_block_forward.1} parent=11 // pred_fallthru
        _
      // Predicated region
      $region21: #{swin_block_forward.1} parent=11 // pred_check
        %p388 = pneg %p110
      $region22: #{swin_block_forward.1} parent=11 // pred_check_branch
        %390 = sbr.rel (%p388) target = $region24
      $region23: #{swin_block_forward.1} parent=11 // pred_region
        _
      $region24: #{swin_block_forward.1} parent=11 // pred_fallthru
        _
      // Predicated region
      $region25: #{swin_block_forward.1} parent=11 // pred_check
        %p391 = pneg %p131
      $region26: #{swin_block_forward.1} parent=11 // pred_check_branch
        %393 = sbr.rel (%p391) target = $region28
      $region27: #{swin_block_forward.1} parent=11 // pred_region
        _
      $region28: #{swin_block_forward.1} parent=11 // pred_fallthru
        _
      // Predicated region
      $region29: #{swin_block_forward.1} parent=11 // pred_check
        %p394 = pneg %p152
      $region30: #{swin_block_forward.1} parent=11 // pred_check_branch
        %396 = sbr.rel (%p394) target = $region32
      $region31: #{swin_block_forward.1} parent=11 // pred_region
        _
      $region32: #{swin_block_forward.1} parent=11 // pred_fallthru
        _
      // Predicated region
      $region33: #{swin_block_forward.1} parent=11 // pred_check
        %p397 = pneg %p173
      $region34: #{swin_block_forward.1} parent=11 // pred_check_branch
        %399 = sbr.rel (%p397) target = $region36
      $region35: #{swin_block_forward.1} parent=11 // pred_region
        _
      $region36: #{swin_block_forward.1} parent=11 // pred_fallthru
        _
      // Predicated region
      $region37: #{swin_block_forward.1} parent=11 // pred_check
        %p400 = pneg %p194
      $region38: #{swin_block_forward.1} parent=11 // pred_check_branch
        %402 = sbr.rel (%p400) target = $region40
      $region39: #{swin_block_forward.1} parent=11 // pred_region
        _
      $region40: #{swin_block_forward.1} parent=11 // pred_fallthru
        _
      // Predicated region
      $region41: #{swin_block_forward.1} parent=11 // pred_check
        %p403 = pneg %p215
      $region42: #{swin_block_forward.1} parent=11 // pred_check_branch
        %405 = sbr.rel (%p403) target = $region44
      $region43: #{swin_block_forward.1} parent=11 // pred_region
        _
      $region44: #{swin_block_forward.1} parent=11 // pred_fallthru
        _
      // Predicated region
      $region45: #{swin_block_forward.1} parent=11 // pred_check
        %p406 = pneg %p236
      $region46: #{swin_block_forward.1} parent=11 // pred_check_branch
        %408 = sbr.rel (%p406) target = $region48
      $region47: #{swin_block_forward.1} parent=11 // pred_region
        _
      $region48: #{swin_block_forward.1} parent=11 // pred_fallthru
        _
      // Predicated region
      $region49: #{swin_block_forward.1} parent=11 // pred_check
        %p409 = pneg %p257
      $region50: #{swin_block_forward.1} parent=11 // pred_check_branch
        %411 = sbr.rel (%p409) target = $region52
      $region51: #{swin_block_forward.1} parent=11 // pred_region
        _
      $region52: #{swin_block_forward.1} parent=11 // pred_fallthru
        _
      // Predicated region
      $region53: #{swin_block_forward.1} parent=11 // pred_check
        %p412 = pneg %p278
      $region54: #{swin_block_forward.1} parent=11 // pred_check_branch
        %414 = sbr.rel (%p412) target = $region56
      $region55: #{swin_block_forward.1} parent=11 // pred_region
        _
      $region56: #{swin_block_forward.1} parent=11 // pred_fallthru
        _
      // Predicated region
      $region57: #{swin_block_forward.1} parent=11 // pred_check
        %p415 = pneg %p299
      $region58: #{swin_block_forward.1} parent=11 // pred_check_branch
        %417 = sbr.rel (%p415) target = $region60
      $region59: #{swin_block_forward.1} parent=11 // pred_region
        _
      $region60: #{swin_block_forward.1} parent=11 // pred_fallthru
        _
      // Predicated region
      $region61: #{swin_block_forward.1} parent=11 // pred_check
        %p418 = pneg %p320
      $region62: #{swin_block_forward.1} parent=11 // pred_check_branch
        %420 = sbr.rel (%p418) target = $region64
      $region63: #{swin_block_forward.1} parent=11 // pred_region
        _
      $region64: #{swin_block_forward.1} parent=11 // pred_fallthru
        _
      // Predicated region
      $region65: #{swin_block_forward.1} parent=11 // pred_check
        %p421 = pneg %p341
      $region66: #{swin_block_forward.1} parent=11 // pred_check_branch
        %423 = sbr.rel (%p421) target = $region68
      $region67: #{swin_block_forward.1} parent=11 // pred_region
        _
      $region68: #{swin_block_forward.1} parent=11 // pred_fallthru
        _
    $region12: #{swin_block_forward.1} parent=5 // pred_fallthru
      _
    %p424 = scmp.lt.s32.totalorder %s21, 2
    // Predicated region
    $region69: #{swin_block_forward.1} parent=5 // pred_check
      %p425 = pneg %p424
    $region70: #{swin_block_forward.1} parent=5 // pred_check_branch
      %427 = sbr.rel (%p425) target = $region72
    $region71: #{swin_block_forward.1} parent=5 // pred_region
      // Predicated region
      $region73: #{swin_block_forward.1} parent=71 // pred_check
        %p428 = pneg %p41
      $region74: #{swin_block_forward.1} parent=71 // pred_check_branch
        %430 = sbr.rel (%p428) target = $region76
      $region75: #{swin_block_forward.1} parent=71 // pred_region
        %p431 = scmp.lt.s32.totalorder %s21, 1
        %s432 = scalar_select %p431, %s21, 1
        %s433 = smul.addr %s432, 8
        %s434 = smul.addr %s433, 8
        %s435 = scalar_lea.vmem %s0, %s434
      $region76: #{swin_block_forward.1} parent=71 // pred_fallthru
        _
    $region72: #{swin_block_forward.1} parent=5 // pred_fallthru
      _
    %p436 = scmp.le.s32.totalorder 1, %s21
    %p437 = scmp.lt.s32.totalorder %s21, 3
    %p438 = pnand %p436, %p437
    %p439 = pneg %p438
    // Predicated region
    $region77: #{swin_block_forward.1} parent=5 // pred_check
      _
    $region78: #{swin_block_forward.1} parent=5 // pred_check_branch
      %441 = sbr.rel (%p438) target = $region80
    $region79: #{swin_block_forward.1} parent=5 // pred_region
      %s442 = ssub.s32 %s21, 1
      %p443 = scmp.lt.s32.totalorder %s26, 1
      %s444 = scalar_select %p443, %s26, 1
      %s445 = smul.addr %s444, 8
      %s446 = smul.addr %s445, 8
      %s447 = scalar_lea.vmem %s0, %s446
      %p448 = pneg %p47
      %p449 = pneg %p44
      %p450 = pneg %p68
      %p451 = pneg %p65
      %p452 = pneg %p89
      %p453 = pneg %p86
      %p454 = pneg %p110
      %p455 = pneg %p107
      %p456 = pneg %p131
      %p457 = pneg %p128
      %p458 = pneg %p152
      %p459 = pneg %p149
      %p460 = pneg %p173
      %p461 = pneg %p170
      %p462 = pneg %p194
      %p463 = pneg %p191
      %p464 = pneg %p215
      %p465 = pneg %p212
      %p466 = pneg %p236
      %p467 = pneg %p233
      %p468 = pneg %p257
      %p469 = pneg %p254
      %p470 = pneg %p278
      %p471 = pneg %p275
      %p472 = pneg %p299
      %p473 = pneg %p296
      %p474 = pneg %p320
      %p475 = pneg %p317
      %p476 = pneg %p341
      %p477 = pneg %p338
      %p478 = pneg %p367
      %p479 = pneg %p364
      %p480 = scmp.lt.s32.totalorder %s26, 1
      %s481 = scalar_select %p480, %s26, 1
      %s482 = smul.addr %s481, 8
      %s483 = smul.addr %s482, 8
      %s484 = scalar_lea.vmem %s15, %s483
      %p485 = scmp.lt.s32.totalorder %s26, 1
      %s486 = scalar_select %p485, %s26, 1
      %s487 = smul.addr %s486, 8
      %s488 = smul.addr %s487, 8
      %s489 = scalar_lea.vmem %s0, %s488
      %p490 = scmp.lt.s32.totalorder %s26, 1
      %s491 = scalar_select %p490, %s26, 1
      %s492 = smul.addr %s491, 8
      %s493 = smul.addr %s492, 8
      %s494 = scalar_lea.vmem %s15, %s493
      %v495 = vld [vmem:[%s489] sm:$0xff]
      %v496 = vld [vmem:[%s489 + $0x8] sm:$0xff]
      %v497 = vld [vmem:[%s489 + $0x10] sm:$0xff]
      %v498 = vld [vmem:[%s489 + $0x18] sm:$0xff]
      %v499 = vld [vmem:[%s489 + $0x20] sm:$0xff]
      %v500 = vld [vmem:[%s489 + $0x28] sm:$0xff]
      %v501 = vld [vmem:[%s489 + $0x30] sm:$0xff]
      %v502 = vld [vmem:[%s489 + $0x38] sm:$0xff]
      %vm503 = vcmask 130048
      %v504 = vsel %vm503, %v495, 0.0
      %505 = vadd.xlane.f32.xlu0 %v504
      %v506 = vpop.xlane.xlu0 %505
      %v507 = vsel %vm503, %v496, 0.0
      %508 = vadd.xlane.f32.xlu0 %v507
      %v509 = vpop.xlane.xlu0 %508
      %v510 = vsel %vm503, %v497, 0.0
      %511 = vadd.xlane.f32.xlu0 %v510
      %v512 = vpop.xlane.xlu0 %511
      %v513 = vsel %vm503, %v498, 0.0
      %514 = vadd.xlane.f32.xlu0 %v513
      %v515 = vpop.xlane.xlu0 %514
      %v516 = vsel %vm503, %v499, 0.0
      %517 = vadd.xlane.f32.xlu0 %v516
      %v518 = vpop.xlane.xlu0 %517
      %v519 = vsel %vm503, %v500, 0.0
      %520 = vadd.xlane.f32.xlu0 %v519
      %v521 = vpop.xlane.xlu0 %520
      %v522 = vsel %vm503, %v501, 0.0
      %523 = vadd.xlane.f32.xlu0 %v522
      %v524 = vpop.xlane.xlu0 %523
      %v525 = vsel %vm503, %v502, 0.0
      %526 = vadd.xlane.f32.xlu0 %v525
      %v527 = vpop.xlane.xlu0 %526
      %v528 = vrcp.pop 16.0
      %v529 = vmul.f32 %v506, %v528
      %v530 = vmul.f32 %v509, %v528
      %v531 = vmul.f32 %v512, %v528
      %v532 = vmul.f32 %v515, %v528
      %v533 = vmul.f32 %v518, %v528
      %v534 = vmul.f32 %v521, %v528
      %v535 = vmul.f32 %v524, %v528
      %v536 = vmul.f32 %v527, %v528
      %v537 = vsub.f32 %v495, %v529
      %v538 = vsub.f32 %v496, %v530
      %v539 = vsub.f32 %v497, %v531
      %v540 = vsub.f32 %v498, %v532
      %v541 = vsub.f32 %v499, %v533
      %v542 = vsub.f32 %v500, %v534
      %v543 = vsub.f32 %v501, %v535
      %v544 = vsub.f32 %v502, %v536
      %v545 = vmul.f32 %v537, %v537
      %v546 = vmul.f32 %v538, %v538
      %v547 = vmul.f32 %v539, %v539
      %v548 = vmul.f32 %v540, %v540
      %v549 = vmul.f32 %v541, %v541
      %v550 = vmul.f32 %v542, %v542
      %v551 = vmul.f32 %v543, %v543
      %v552 = vmul.f32 %v544, %v544
      %v553 = vsel %vm503, %v545, 0.0
      %554 = vadd.xlane.f32.xlu0 %v553
      %v555 = vpop.xlane.xlu0 %554
      %v556 = vsel %vm503, %v546, 0.0
      %557 = vadd.xlane.f32.xlu0 %v556
      %v558 = vpop.xlane.xlu0 %557
      %v559 = vsel %vm503, %v547, 0.0
      %560 = vadd.xlane.f32.xlu0 %v559
      %v561 = vpop.xlane.xlu0 %560
      %v562 = vsel %vm503, %v548, 0.0
      %563 = vadd.xlane.f32.xlu0 %v562
      %v564 = vpop.xlane.xlu0 %563
      %v565 = vsel %vm503, %v549, 0.0
      %566 = vadd.xlane.f32.xlu0 %v565
      %v567 = vpop.xlane.xlu0 %566
      %v568 = vsel %vm503, %v550, 0.0
      %569 = vadd.xlane.f32.xlu0 %v568
      %v570 = vpop.xlane.xlu0 %569
      %v571 = vsel %vm503, %v551, 0.0
      %572 = vadd.xlane.f32.xlu0 %v571
      %v573 = vpop.xlane.xlu0 %572
      %v574 = vsel %vm503, %v552, 0.0
      %575 = vadd.xlane.f32.xlu0 %v574
      %v576 = vpop.xlane.xlu0 %575
      %v577 = vmul.f32 %v555, %v528
      %v578 = vmul.f32 %v558, %v528
      %v579 = vmul.f32 %v561, %v528
      %v580 = vmul.f32 %v564, %v528
      %v581 = vmul.f32 %v567, %v528
      %v582 = vmul.f32 %v570, %v528
      %v583 = vmul.f32 %v573, %v528
      %v584 = vmul.f32 %v576, %v528
      %v585 = vadd.f32 %v577, 1e-05
      %v586 = vadd.f32 %v578, 1e-05
      %v587 = vadd.f32 %v579, 1e-05
      %v588 = vadd.f32 %v580, 1e-05
      %v589 = vadd.f32 %v581, 1e-05
      %v590 = vadd.f32 %v582, 1e-05
      %v591 = vadd.f32 %v583, 1e-05
      %v592 = vadd.f32 %v584, 1e-05
      %v593 = vrsqrt.pop %v585
      %v594 = vrsqrt.pop %v586
      %v595 = vrsqrt.pop %v587
      %v596 = vrsqrt.pop %v588
      %v597 = vrsqrt.pop %v589
      %v598 = vrsqrt.pop %v590
      %v599 = vrsqrt.pop %v591
      %v600 = vrsqrt.pop %v592
      %v601 = vmul.f32 %v537, %v593
      %v602 = vmul.f32 %v538, %v594
      %v603 = vmul.f32 %v539, %v595
      %v604 = vmul.f32 %v540, %v596
      %v605 = vmul.f32 %v541, %v597
      %v606 = vmul.f32 %v542, %v598
      %v607 = vmul.f32 %v543, %v599
      %v608 = vmul.f32 %v544, %v600
      %v609 = vld [vmem:[%s1] sm:$0x1]
      %v611 = vlaneseq
      %v612 = vshrl.u32 %v611, 7
      %v613 = vsub.s32 0, %v612
      %v614 = vrot.slane %v609, %v613
      %v616 = vmul.f32 %v601, %v614
      %v617 = vmul.f32 %v602, %v614
      %v618 = vmul.f32 %v603, %v614
      %v619 = vmul.f32 %v604, %v614
      %v620 = vmul.f32 %v605, %v614
      %v621 = vmul.f32 %v606, %v614
      %v622 = vmul.f32 %v607, %v614
      %v623 = vmul.f32 %v608, %v614
      %v624 = vld [vmem:[%s2] sm:$0x1]
      %v626 = vlaneseq
      %v627 = vshrl.u32 %v626, 7
      %v628 = vsub.s32 0, %v627
      %v629 = vrot.slane %v624, %v628
      %v631 = vadd.f32 %v616, %v629
      %v632 = vadd.f32 %v617, %v629
      %v633 = vadd.f32 %v618, %v629
      %v634 = vadd.f32 %v619, %v629
      %v635 = vadd.f32 %v620, %v629
      %v636 = vadd.f32 %v621, %v629
      %v637 = vadd.f32 %v622, %v629
      %v638 = vadd.f32 %v623, %v629
      %v639 = vld [vmem:[%s3] sm:$0xff]
      %v640 = vld [vmem:[%s3 + $0x8] sm:$0xff]
      %v641 = vld [vmem:[%s4] sm:$0x1]
      %v643 = vlaneseq
      %v644 = vshrl.u32 %v643, 7
      %v645 = vsub.s32 0, %v644
      %v646 = vrot.slane %v641, %v645
      %v649 = vsel %vm503, %v631, 0
      %v652 = vsel %vm503, %v632, 0
      %v655 = vsel %vm503, %v633, 0
      %v658 = vsel %vm503, %v634, 0
      %v661 = vsel %vm503, %v635, 0
      %v664 = vsel %vm503, %v636, 0
      %v667 = vsel %vm503, %v637, 0
      %v670 = vsel %vm503, %v638, 0
      %672 = vmatprep.subr.mxu0 0.0
      %673 = vmatpush1.msra.mxu0 0.0
      %674 = vmatprep.subr.mxu0 0.0
      %675 = vmatpush1.msra.mxu0 0.0
      %676 = vmatprep.subr.mxu0 0.0
      %677 = vmatpush1.msra.mxu0 0.0
      %678 = vmatprep.subr.mxu0 0.0
      %679 = vmatpush1.msra.mxu0 0.0
      %680 = vmatprep.subr.mxu0 0.0
      %681 = vmatpush1.msra.mxu0 0.0
      %682 = vmatprep.subr.mxu0 0.0
      %683 = vmatpush1.msra.mxu0 0.0
      %684 = vmatprep.subr.mxu0 0.0
      %685 = vmatpush1.msra.mxu0 0.0
      %686 = vmatprep.subr.mxu0 0.0
      %687 = vmatpush1.msra.mxu0 0.0
      %688 = vmatprep.subr.mxu0 0.0
      %689 = vmatpush1.msra.mxu0 0.0
      %690 = vmatprep.subr.mxu0 0.0
      %691 = vmatpush1.msra.mxu0 0.0
      %692 = vmatprep.subr.mxu0 0.0
      %693 = vmatpush1.msra.mxu0 0.0
      %694 = vmatprep.subr.mxu0 0.0
      %695 = vmatpush1.msra.mxu0 0.0
      %696 = vmatprep.subr.mxu0 0.0
      %697 = vmatpush1.msra.mxu0 0.0
      %698 = vmatprep.subr.mxu0 0.0
      %699 = vmatpush1.msra.mxu0 0.0
      %700 = vmatprep.subr.mxu0 0.0
      %701 = vmatpush1.msra.mxu0 %v640
      %702 = vmatprep.subr.mxu0 0.0
      %703 = vmatpush1.msra.mxu0 %v639
      %704 = vmatprep.subr.mxu0 0.0
      %705 = vmatpush2.msra.mxu0 0.0
      %706 = vmatprep.subr.mxu0 0.0
      %707 = vmatpush2.msra.mxu0 0.0
      %708 = vmatprep.subr.mxu0 0.0
      %709 = vmatpush2.msra.mxu0 0.0
      %710 = vmatprep.subr.mxu0 0.0
      %711 = vmatpush2.msra.mxu0 0.0
      %712 = vmatprep.subr.mxu0 0.0
      %713 = vmatpush2.msra.mxu0 0.0
      %714 = vmatprep.subr.mxu0 0.0
      %715 = vmatpush2.msra.mxu0 0.0
      %716 = vmatprep.subr.mxu0 0.0
      %717 = vmatpush2.msra.mxu0 0.0
      %718 = vmatprep.subr.mxu0 0.0
      %719 = vmatpush2.msra.mxu0 0.0
      %720 = vmatprep.subr.mxu0 0.0
      %721 = vmatpush2.msra.mxu0 0.0
      %722 = vmatprep.subr.mxu0 0.0
      %723 = vmatpush2.msra.mxu0 0.0
      %724 = vmatprep.subr.mxu0 0.0
      %725 = vmatpush2.msra.mxu0 0.0
      %726 = vmatprep.subr.mxu0 0.0
      %727 = vmatpush2.msra.mxu0 0.0
      %728 = vmatprep.subr.mxu0 0.0
      %729 = vmatpush2.msra.mxu0 0.0
      %730 = vmatprep.subr.mxu0 0.0
      %731 = vmatpush2.msra.mxu0 0.0
      %732 = vmatprep.subr.mxu0 0.0
      %733 = vmatpush2.msra.mxu0 0.0
      %734 = vmatprep.subr.mxu0 0.0
      %735 = vmatpush2.msra.mxu0 0.0
      %736 = vmatprep.mubr.f32.mxu0 0.0
      %737 = vmatmul.mubr.f32.gmra.mxu0 %v649
      %v738 = vpop.f32.mrf.mxu0
      %v739 = vadd.f32 %v646, %v738
      %v740 = vpop.f32.mrf.mxu0
      %741 = vmatprep.mubr.f32.mxu0 0.0
      %742 = vmatmul.mubr.f32.gmra.mxu0 %v652
      %v743 = vpop.f32.mrf.mxu0
      %v744 = vadd.f32 %v646, %v743
      %v745 = vpop.f32.mrf.mxu0
      %746 = vmatprep.mubr.f32.mxu0 0.0
      %747 = vmatmul.mubr.f32.gmra.mxu0 %v655
      %v748 = vpop.f32.mrf.mxu0
      %v749 = vadd.f32 %v646, %v748
      %v750 = vpop.f32.mrf.mxu0
      %751 = vmatprep.mubr.f32.mxu0 0.0
      %752 = vmatmul.mubr.f32.gmra.mxu0 %v658
      %v753 = vpop.f32.mrf.mxu0
      %v754 = vadd.f32 %v646, %v753
      %v755 = vpop.f32.mrf.mxu0
      %756 = vmatprep.mubr.f32.mxu0 0.0
      %757 = vmatmul.mubr.f32.gmra.mxu0 %v661
      %v758 = vpop.f32.mrf.mxu0
      %v759 = vadd.f32 %v646, %v758
      %v760 = vpop.f32.mrf.mxu0
      %761 = vmatprep.mubr.f32.mxu0 0.0
      %762 = vmatmul.mubr.f32.gmra.mxu0 %v664
      %v763 = vpop.f32.mrf.mxu0
      %v764 = vadd.f32 %v646, %v763
      %v765 = vpop.f32.mrf.mxu0
      %766 = vmatprep.mubr.f32.mxu0 0.0
      %767 = vmatmul.mubr.f32.gmra.mxu0 %v667
      %v768 = vpop.f32.mrf.mxu0
      %v769 = vadd.f32 %v646, %v768
      %v770 = vpop.f32.mrf.mxu0
      %771 = vmatprep.mubr.f32.mxu0 0.0
      %772 = vmatmul.mubr.f32.gmra.mxu0 %v670
      %v773 = vpop.f32.mrf.mxu0
      %v774 = vadd.f32 %v646, %v773
      %v775 = vpop.f32.mrf.mxu0
      %776 = vdwg.mxu0
      %v777 = vmul.f32 %v739, 0.5
      %v778 = vmul.f32 %v744, 0.5
      %v779 = vmul.f32 %v749, 0.5
      %v780 = vmul.f32 %v754, 0.5
      %v781 = vmul.f32 %v759, 0.5
      %v782 = vmul.f32 %v764, 0.5
      %v783 = vmul.f32 %v769, 0.5
      %v784 = vmul.f32 %v774, 0.5
      %v785 = vld [vmem:[%s7] sm:$0xff]
      %v786 = vld [vmem:[%s7 + $0x8] sm:$0xff]
      %v787 = vld [vmem:[%s7 + $0x10] sm:$0xff]
      %v788 = vld [vmem:[%s7 + $0x18] sm:$0xff]
      %v789 = vld [vmem:[%s7 + $0x20] sm:$0xff]
      %v790 = vld [vmem:[%s7 + $0x28] sm:$0xff]
      %v791 = vld [vmem:[%s7 + $0x30] sm:$0xff]
      %v792 = vld [vmem:[%s7 + $0x38] sm:$0xff]
      %v793 = vld [vmem:[%s7 + $0x40] sm:$0xff]
      %v794 = vld [vmem:[%s7 + $0x48] sm:$0xff]
      %v795 = vld [vmem:[%s7 + $0x50] sm:$0xff]
      %v796 = vld [vmem:[%s7 + $0x58] sm:$0xff]
      %v797 = vld [vmem:[%s7 + $0x60] sm:$0xff]
      %v798 = vld [vmem:[%s7 + $0x68] sm:$0xff]
      %v799 = vld [vmem:[%s7 + $0x70] sm:$0xff]
      %v800 = vld [vmem:[%s7 + $0x78] sm:$0xff]
      %v801 = vld [vmem:[%s7 + $0x80] sm:$0xff]
      %v802 = vld [vmem:[%s7 + $0x88] sm:$0xff]
      %v803 = vld [vmem:[%s7 + $0x90] sm:$0xff]
      %v804 = vld [vmem:[%s7 + $0x98] sm:$0xff]
      %v805 = vld [vmem:[%s7 + $0xa0] sm:$0xff]
      %v806 = vld [vmem:[%s7 + $0xa8] sm:$0xff]
      %v807 = vld [vmem:[%s7 + $0xb0] sm:$0xff]
      %v808 = vld [vmem:[%s7 + $0xb8] sm:$0xff]
      %v809 = vld [vmem:[%s7 + $0xc0] sm:$0xff]
      %v810 = vld [vmem:[%s7 + $0xc8] sm:$0xff]
      %v811 = vld [vmem:[%s7 + $0xd0] sm:$0xff]
      %v812 = vld [vmem:[%s7 + $0xd8] sm:$0xff]
      %v813 = vld [vmem:[%s7 + $0xe0] sm:$0xff]
      %v814 = vld [vmem:[%s7 + $0xe8] sm:$0xff]
      %v815 = vld [vmem:[%s7 + $0xf0] sm:$0xff]
      %v816 = vld [vmem:[%s7 + $0xf8] sm:$0xff]
      %v817 = vmul.f32 %v777, %v785
      %v818 = vmul.f32 %v778, %v786
      %v819 = vmul.f32 %v779, %v787
      %v820 = vmul.f32 %v780, %v788
      %v821 = vmul.f32 %v781, %v789
      %v822 = vmul.f32 %v782, %v790
      %v823 = vmul.f32 %v783, %v791
      %v824 = vmul.f32 %v784, %v792
      %v825 = vmul.f32 %v777, %v793
      %v826 = vmul.f32 %v778, %v794
      %v827 = vmul.f32 %v779, %v795
      %v828 = vmul.f32 %v780, %v796
      %v829 = vmul.f32 %v781, %v797
      %v830 = vmul.f32 %v782, %v798
      %v831 = vmul.f32 %v783, %v799
      %v832 = vmul.f32 %v784, %v800
      %v833 = vmul.f32 %v777, %v801
      %v834 = vmul.f32 %v778, %v802
      %v835 = vmul.f32 %v779, %v803
      %v836 = vmul.f32 %v780, %v804
      %v837 = vmul.f32 %v781, %v805
      %v838 = vmul.f32 %v782, %v806
      %v839 = vmul.f32 %v783, %v807
      %v840 = vmul.f32 %v784, %v808
      %v841 = vmul.f32 %v777, %v809
      %v842 = vmul.f32 %v778, %v810
      %v843 = vmul.f32 %v779, %v811
      %v844 = vmul.f32 %v780, %v812
      %v845 = vmul.f32 %v781, %v813
      %v846 = vmul.f32 %v782, %v814
      %v847 = vmul.f32 %v783, %v815
      %v848 = vmul.f32 %v784, %v816
      %v849 = vld [vmem:[%s8] sm:$0xff]
      %v850 = vld [vmem:[%s8 + $0x8] sm:$0xff]
      %v851 = vld [vmem:[%s8 + $0x10] sm:$0xff]
      %v852 = vld [vmem:[%s8 + $0x18] sm:$0xff]
      %v853 = vld [vmem:[%s8 + $0x20] sm:$0xff]
      %v854 = vld [vmem:[%s8 + $0x28] sm:$0xff]
      %v855 = vld [vmem:[%s8 + $0x30] sm:$0xff]
      %v856 = vld [vmem:[%s8 + $0x38] sm:$0xff]
      %v857 = vld [vmem:[%s8 + $0x40] sm:$0xff]
      %v858 = vld [vmem:[%s8 + $0x48] sm:$0xff]
      %v859 = vld [vmem:[%s8 + $0x50] sm:$0xff]
      %v860 = vld [vmem:[%s8 + $0x58] sm:$0xff]
      %v861 = vld [vmem:[%s8 + $0x60] sm:$0xff]
      %v862 = vld [vmem:[%s8 + $0x68] sm:$0xff]
      %v863 = vld [vmem:[%s8 + $0x70] sm:$0xff]
      %v864 = vld [vmem:[%s8 + $0x78] sm:$0xff]
      %v865 = vld [vmem:[%s8 + $0x80] sm:$0xff]
      %v866 = vld [vmem:[%s8 + $0x88] sm:$0xff]
      %v867 = vld [vmem:[%s8 + $0x90] sm:$0xff]
      %v868 = vld [vmem:[%s8 + $0x98] sm:$0xff]
      %v869 = vld [vmem:[%s8 + $0xa0] sm:$0xff]
      %v870 = vld [vmem:[%s8 + $0xa8] sm:$0xff]
      %v871 = vld [vmem:[%s8 + $0xb0] sm:$0xff]
      %v872 = vld [vmem:[%s8 + $0xb8] sm:$0xff]
      %v873 = vld [vmem:[%s8 + $0xc0] sm:$0xff]
      %v874 = vld [vmem:[%s8 + $0xc8] sm:$0xff]
      %v875 = vld [vmem:[%s8 + $0xd0] sm:$0xff]
      %v876 = vld [vmem:[%s8 + $0xd8] sm:$0xff]
      %v877 = vld [vmem:[%s8 + $0xe0] sm:$0xff]
      %v878 = vld [vmem:[%s8 + $0xe8] sm:$0xff]
      %v879 = vld [vmem:[%s8 + $0xf0] sm:$0xff]
      %v880 = vld [vmem:[%s8 + $0xf8] sm:$0xff]
      %889 = vrot.lane.b32.xlu0 %v739, 112
      %v890 = vpop.permute.xlu0 %889
      %891 = vrot.lane.b32.xlu0 %v744, 112
      %v892 = vpop.permute.xlu0 %891
      %893 = vrot.lane.b32.xlu0 %v749, 112
      %v894 = vpop.permute.xlu0 %893
      %895 = vrot.lane.b32.xlu0 %v754, 112
      %v896 = vpop.permute.xlu0 %895
      %897 = vrot.lane.b32.xlu0 %v759, 112
      %v898 = vpop.permute.xlu0 %897
      %899 = vrot.lane.b32.xlu0 %v764, 112
      %v900 = vpop.permute.xlu0 %899
      %901 = vrot.lane.b32.xlu0 %v769, 112
      %v902 = vpop.permute.xlu0 %901
      %903 = vrot.lane.b32.xlu0 %v774, 112
      %v904 = vpop.permute.xlu0 %903
      %v906 = vsel %vm503, %v817, 0
      %v909 = vsel %vm503, %v818, 0
      %v912 = vsel %vm503, %v819, 0
      %v915 = vsel %vm503, %v820, 0
      %v918 = vsel %vm503, %v821, 0
      %v921 = vsel %vm503, %v822, 0
      %v924 = vsel %vm503, %v823, 0
      %v927 = vsel %vm503, %v824, 0
      %v930 = vsel %vm503, %v825, 0
      %v933 = vsel %vm503, %v826, 0
      %v936 = vsel %vm503, %v827, 0
      %v939 = vsel %vm503, %v828, 0
      %v942 = vsel %vm503, %v829, 0
      %v945 = vsel %vm503, %v830, 0
      %v948 = vsel %vm503, %v831, 0
      %v951 = vsel %vm503, %v832, 0
      %v954 = vsel %vm503, %v833, 0
      %v957 = vsel %vm503, %v834, 0
      %v960 = vsel %vm503, %v835, 0
      %v963 = vsel %vm503, %v836, 0
      %v966 = vsel %vm503, %v837, 0
      %v969 = vsel %vm503, %v838, 0
      %v972 = vsel %vm503, %v839, 0
      %v975 = vsel %vm503, %v840, 0
      %v978 = vsel %vm503, %v841, 0
      %v981 = vsel %vm503, %v842, 0
      %v984 = vsel %vm503, %v843, 0
      %v987 = vsel %vm503, %v844, 0
      %v990 = vsel %vm503, %v845, 0
      %v993 = vsel %vm503, %v846, 0
      %v996 = vsel %vm503, %v847, 0
      %v999 = vsel %vm503, %v848, 0
      %v1001 = vsel %vm503, %v890, 0
      %v1003 = vsel %vm503, %v892, 0
      %v1005 = vsel %vm503, %v894, 0
      %v1007 = vsel %vm503, %v896, 0
      %v1009 = vsel %vm503, %v898, 0
      %v1011 = vsel %vm503, %v900, 0
      %v1013 = vsel %vm503, %v902, 0
      %v1015 = vsel %vm503, %v904, 0
      %1017 = vmatprep.subr.mxu0 0.0
      %1018 = vmatpush1.xpose.msra.mxu0 0.0
      %1019 = vmatprep.subr.mxu0 0.0
      %1020 = vmatpush1.xpose.msra.mxu0 0.0
      %1021 = vmatprep.subr.mxu0 0.0
      %1022 = vmatpush1.xpose.msra.mxu0 0.0
      %1023 = vmatprep.subr.mxu0 0.0
      %1024 = vmatpush1.xpose.msra.mxu0 0.0
      %1025 = vmatprep.subr.mxu0 0.0
      %1026 = vmatpush1.xpose.msra.mxu0 0.0
      %1027 = vmatprep.subr.mxu0 0.0
      %1028 = vmatpush1.xpose.msra.mxu0 0.0
      %1029 = vmatprep.subr.mxu0 0.0
      %1030 = vmatpush1.xpose.msra.mxu0 0.0
      %1031 = vmatprep.subr.mxu0 0.0
      %1032 = vmatpush1.xpose.msra.mxu0 0.0
      %1033 = vmatprep.subr.mxu0 0.0
      %1034 = vmatpush1.xpose.msra.mxu0 %v1015
      %1035 = vmatprep.subr.mxu0 0.0
      %1036 = vmatpush1.xpose.msra.mxu0 %v1013
      %1037 = vmatprep.subr.mxu0 0.0
      %1038 = vmatpush1.xpose.msra.mxu0 %v1011
      %1039 = vmatprep.subr.mxu0 0.0
      %1040 = vmatpush1.xpose.msra.mxu0 %v1009
      %1041 = vmatprep.subr.mxu0 0.0
      %1042 = vmatpush1.xpose.msra.mxu0 %v1007
      %1043 = vmatprep.subr.mxu0 0.0
      %1044 = vmatpush1.xpose.msra.mxu0 %v1005
      %1045 = vmatprep.subr.mxu0 0.0
      %1046 = vmatpush1.xpose.msra.mxu0 %v1003
      %1047 = vmatprep.subr.mxu0 0.0
      %1048 = vmatpush1.xpose.msra.mxu0 %v1001
      %1049 = vmatprep.subr.mxu0 0.0
      %1050 = vmatpush2.xpose.msra.mxu0 0.0
      %1051 = vmatprep.subr.mxu0 0.0
      %1052 = vmatpush2.xpose.msra.mxu0 0.0
      %1053 = vmatprep.subr.mxu0 0.0
      %1054 = vmatpush2.xpose.msra.mxu0 0.0
      %1055 = vmatprep.subr.mxu0 0.0
      %1056 = vmatpush2.xpose.msra.mxu0 0.0
      %1057 = vmatprep.subr.mxu0 0.0
      %1058 = vmatpush2.xpose.msra.mxu0 0.0
      %1059 = vmatprep.subr.mxu0 0.0
      %1060 = vmatpush2.xpose.msra.mxu0 0.0
      %1061 = vmatprep.subr.mxu0 0.0
      %1062 = vmatpush2.xpose.msra.mxu0 0.0
      %1063 = vmatprep.subr.mxu0 0.0
      %1064 = vmatpush2.xpose.msra.mxu0 0.0
      %1065 = vmatprep.subr.mxu0 0.0
      %1066 = vmatpush2.xpose.msra.mxu0 0.0
      %1067 = vmatprep.subr.mxu0 0.0
      %1068 = vmatpush2.xpose.msra.mxu0 0.0
      %1069 = vmatprep.subr.mxu0 0.0
      %1070 = vmatpush2.xpose.msra.mxu0 0.0
      %1071 = vmatprep.subr.mxu0 0.0
      %1072 = vmatpush2.xpose.msra.mxu0 0.0
      %1073 = vmatprep.subr.mxu0 0.0
      %1074 = vmatpush2.xpose.msra.mxu0 0.0
      %1075 = vmatprep.subr.mxu0 0.0
      %1076 = vmatpush2.xpose.msra.mxu0 0.0
      %1077 = vmatprep.subr.mxu0 0.0
      %1078 = vmatpush2.xpose.msra.mxu0 0.0
      %1079 = vmatprep.subr.mxu0 0.0
      %1080 = vmatpush2.xpose.msra.mxu0 0.0
      %1081 = vmatprep.mubr.f32.mxu0 0.0
      %1082 = vmatmul.mubr.f32.gmra.mxu0 %v906
      %v1083 = vpop.f32.mrf.mxu0
      %v1084 = vadd.f32 %v849, %v1083
      %v1085 = vpop.f32.mrf.mxu0
      %1086 = vmatprep.mubr.f32.mxu0 0.0
      %1087 = vmatmul.mubr.f32.gmra.mxu0 %v909
      %v1088 = vpop.f32.mrf.mxu0
      %v1089 = vadd.f32 %v850, %v1088
      %v1090 = vpop.f32.mrf.mxu0
      %1091 = vmatprep.mubr.f32.mxu0 0.0
      %1092 = vmatmul.mubr.f32.gmra.mxu0 %v912
      %v1093 = vpop.f32.mrf.mxu0
      %v1094 = vadd.f32 %v851, %v1093
      %v1095 = vpop.f32.mrf.mxu0
      %1096 = vmatprep.mubr.f32.mxu0 0.0
      %1097 = vmatmul.mubr.f32.gmra.mxu0 %v915
      %v1098 = vpop.f32.mrf.mxu0
      %v1099 = vadd.f32 %v852, %v1098
      %v1100 = vpop.f32.mrf.mxu0
      %1101 = vmatprep.mubr.f32.mxu0 0.0
      %1102 = vmatmul.mubr.f32.gmra.mxu0 %v918
      %v1103 = vpop.f32.mrf.mxu0
      %v1104 = vadd.f32 %v853, %v1103
      %v1105 = vpop.f32.mrf.mxu0
      %1106 = vmatprep.mubr.f32.mxu0 0.0
      %1107 = vmatmul.mubr.f32.gmra.mxu0 %v921
      %v1108 = vpop.f32.mrf.mxu0
      %v1109 = vadd.f32 %v854, %v1108
      %v1110 = vpop.f32.mrf.mxu0
      %1111 = vmatprep.mubr.f32.mxu0 0.0
      %1112 = vmatmul.mubr.f32.gmra.mxu0 %v924
      %v1113 = vpop.f32.mrf.mxu0
      %v1114 = vadd.f32 %v855, %v1113
      %v1115 = vpop.f32.mrf.mxu0
      %1116 = vmatprep.mubr.f32.mxu0 0.0
      %1117 = vmatmul.mubr.f32.gmra.mxu0 %v927
      %v1118 = vpop.f32.mrf.mxu0
      %v1119 = vadd.f32 %v856, %v1118
      %v1120 = vpop.f32.mrf.mxu0
      %1121 = vmatprep.mubr.f32.mxu0 0.0
      %1122 = vmatmul.mubr.f32.gmra.mxu0 %v930
      %v1123 = vpop.f32.mrf.mxu0
      %v1124 = vadd.f32 %v857, %v1123
      %v1125 = vpop.f32.mrf.mxu0
      %1126 = vmatprep.mubr.f32.mxu0 0.0
      %1127 = vmatmul.mubr.f32.gmra.mxu0 %v933
      %v1128 = vpop.f32.mrf.mxu0
      %v1129 = vadd.f32 %v858, %v1128
      %v1130 = vpop.f32.mrf.mxu0
      %1131 = vmatprep.mubr.f32.mxu0 0.0
      %1132 = vmatmul.mubr.f32.gmra.mxu0 %v936
      %v1133 = vpop.f32.mrf.mxu0
      %v1134 = vadd.f32 %v859, %v1133
      %v1135 = vpop.f32.mrf.mxu0
      %1136 = vmatprep.mubr.f32.mxu0 0.0
      %1137 = vmatmul.mubr.f32.gmra.mxu0 %v939
      %v1138 = vpop.f32.mrf.mxu0
      %v1139 = vadd.f32 %v860, %v1138
      %v1140 = vpop.f32.mrf.mxu0
      %1141 = vmatprep.mubr.f32.mxu0 0.0
      %1142 = vmatmul.mubr.f32.gmra.mxu0 %v942
      %v1143 = vpop.f32.mrf.mxu0
      %v1144 = vadd.f32 %v861, %v1143
      %v1145 = vpop.f32.mrf.mxu0
      %1146 = vmatprep.mubr.f32.mxu0 0.0
      %1147 = vmatmul.mubr.f32.gmra.mxu0 %v945
      %v1148 = vpop.f32.mrf.mxu0
      %v1149 = vadd.f32 %v862, %v1148
      %v1150 = vpop.f32.mrf.mxu0
      %1151 = vmatprep.mubr.f32.mxu0 0.0
      %1152 = vmatmul.mubr.f32.gmra.mxu0 %v948
      %v1153 = vpop.f32.mrf.mxu0
      %v1154 = vadd.f32 %v863, %v1153
      %v1155 = vpop.f32.mrf.mxu0
      %1156 = vmatprep.mubr.f32.mxu0 0.0
      %1157 = vmatmul.mubr.f32.gmra.mxu0 %v951
      %v1158 = vpop.f32.mrf.mxu0
      %v1159 = vadd.f32 %v864, %v1158
      %v1160 = vpop.f32.mrf.mxu0
      %1161 = vmatprep.mubr.f32.mxu0 0.0
      %1162 = vmatmul.mubr.f32.gmra.mxu0 %v954
      %v1163 = vpop.f32.mrf.mxu0
      %v1164 = vadd.f32 %v865, %v1163
      %v1165 = vpop.f32.mrf.mxu0
      %1166 = vmatprep.mubr.f32.mxu0 0.0
      %1167 = vmatmul.mubr.f32.gmra.mxu0 %v957
      %v1168 = vpop.f32.mrf.mxu0
      %v1169 = vadd.f32 %v866, %v1168
      %v1170 = vpop.f32.mrf.mxu0
      %1171 = vmatprep.mubr.f32.mxu0 0.0
      %1172 = vmatmul.mubr.f32.gmra.mxu0 %v960
      %v1173 = vpop.f32.mrf.mxu0
      %v1174 = vadd.f32 %v867, %v1173
      %v1175 = vpop.f32.mrf.mxu0
      %1176 = vmatprep.mubr.f32.mxu0 0.0
      %1177 = vmatmul.mubr.f32.gmra.mxu0 %v963
      %v1178 = vpop.f32.mrf.mxu0
      %v1179 = vadd.f32 %v868, %v1178
      %v1180 = vpop.f32.mrf.mxu0
      %1181 = vmatprep.mubr.f32.mxu0 0.0
      %1182 = vmatmul.mubr.f32.gmra.mxu0 %v966
      %v1183 = vpop.f32.mrf.mxu0
      %v1184 = vadd.f32 %v869, %v1183
      %v1185 = vpop.f32.mrf.mxu0
      %1186 = vmatprep.mubr.f32.mxu0 0.0
      %1187 = vmatmul.mubr.f32.gmra.mxu0 %v969
      %v1188 = vpop.f32.mrf.mxu0
      %v1189 = vadd.f32 %v870, %v1188
      %v1190 = vpop.f32.mrf.mxu0
      %1191 = vmatprep.mubr.f32.mxu0 0.0
      %1192 = vmatmul.mubr.f32.gmra.mxu0 %v972
      %v1193 = vpop.f32.mrf.mxu0
      %v1194 = vadd.f32 %v871, %v1193
      %v1195 = vpop.f32.mrf.mxu0
      %1196 = vmatprep.mubr.f32.mxu0 0.0
      %1197 = vmatmul.mubr.f32.gmra.mxu0 %v975
      %v1198 = vpop.f32.mrf.mxu0
      %v1199 = vadd.f32 %v872, %v1198
      %v1200 = vpop.f32.mrf.mxu0
      %1201 = vmatprep.mubr.f32.mxu0 0.0
      %1202 = vmatmul.mubr.f32.gmra.mxu0 %v978
      %v1203 = vpop.f32.mrf.mxu0
      %v1204 = vadd.f32 %v873, %v1203
      %v1205 = vpop.f32.mrf.mxu0
      %1206 = vmatprep.mubr.f32.mxu0 0.0
      %1207 = vmatmul.mubr.f32.gmra.mxu0 %v981
      %v1208 = vpop.f32.mrf.mxu0
      %v1209 = vadd.f32 %v874, %v1208
      %v1210 = vpop.f32.mrf.mxu0
      %1211 = vmatprep.mubr.f32.mxu0 0.0
      %1212 = vmatmul.mubr.f32.gmra.mxu0 %v984
      %v1213 = vpop.f32.mrf.mxu0
      %v1214 = vadd.f32 %v875, %v1213
      %v1215 = vpop.f32.mrf.mxu0
      %1216 = vmatprep.mubr.f32.mxu0 0.0
      %1217 = vmatmul.mubr.f32.gmra.mxu0 %v987
      %v1218 = vpop.f32.mrf.mxu0
      %v1219 = vadd.f32 %v876, %v1218
      %v1220 = vpop.f32.mrf.mxu0
      %1221 = vmatprep.mubr.f32.mxu0 0.0
      %1222 = vmatmul.mubr.f32.gmra.mxu0 %v990
      %v1223 = vpop.f32.mrf.mxu0
      %v1224 = vadd.f32 %v877, %v1223
      %v1225 = vpop.f32.mrf.mxu0
      %1226 = vmatprep.mubr.f32.mxu0 0.0
      %1227 = vmatmul.mubr.f32.gmra.mxu0 %v993
      %v1228 = vpop.f32.mrf.mxu0
      %v1229 = vadd.f32 %v878, %v1228
      %v1230 = vpop.f32.mrf.mxu0
      %1231 = vmatprep.mubr.f32.mxu0 0.0
      %1232 = vmatmul.mubr.f32.gmra.mxu0 %v996
      %v1233 = vpop.f32.mrf.mxu0
      %v1234 = vadd.f32 %v879, %v1233
      %v1235 = vpop.f32.mrf.mxu0
      %1236 = vmatprep.mubr.f32.mxu0 0.0
      %1237 = vmatmul.mubr.f32.gmra.mxu0 %v999
      %v1238 = vpop.f32.mrf.mxu0
      %v1239 = vadd.f32 %v880, %v1238
      %v1240 = vpop.f32.mrf.mxu0
      %1241 = vdwg.mxu0
      %vm1242 = vcmask 523264
      %v1243 = vsel %vm1242, %v1084, -inf
      %1244 = vmax.xlane.f32.xlu0 %v1243
      %v1245 = vpop.xlane.xlu0 %1244
      %v1246 = vsel %vm1242, %v1089, -inf
      %1247 = vmax.xlane.f32.xlu0 %v1246
      %v1248 = vpop.xlane.xlu0 %1247
      %v1249 = vsel %vm1242, %v1094, -inf
      %1250 = vmax.xlane.f32.xlu0 %v1249
      %v1251 = vpop.xlane.xlu0 %1250
      %v1252 = vsel %vm1242, %v1099, -inf
      %1253 = vmax.xlane.f32.xlu0 %v1252
      %v1254 = vpop.xlane.xlu0 %1253
      %v1255 = vsel %vm1242, %v1104, -inf
      %1256 = vmax.xlane.f32.xlu0 %v1255
      %v1257 = vpop.xlane.xlu0 %1256
      %v1258 = vsel %vm1242, %v1109, -inf
      %1259 = vmax.xlane.f32.xlu0 %v1258
      %v1260 = vpop.xlane.xlu0 %1259
      %v1261 = vsel %vm1242, %v1114, -inf
      %1262 = vmax.xlane.f32.xlu0 %v1261
      %v1263 = vpop.xlane.xlu0 %1262
      %v1264 = vsel %vm1242, %v1119, -inf
      %1265 = vmax.xlane.f32.xlu0 %v1264
      %v1266 = vpop.xlane.xlu0 %1265
      %v1267 = vsel %vm1242, %v1124, -inf
      %1268 = vmax.xlane.f32.xlu0 %v1267
      %v1269 = vpop.xlane.xlu0 %1268
      %v1270 = vsel %vm1242, %v1129, -inf
      %1271 = vmax.xlane.f32.xlu0 %v1270
      %v1272 = vpop.xlane.xlu0 %1271
      %v1273 = vsel %vm1242, %v1134, -inf
      %1274 = vmax.xlane.f32.xlu0 %v1273
      %v1275 = vpop.xlane.xlu0 %1274
      %v1276 = vsel %vm1242, %v1139, -inf
      %1277 = vmax.xlane.f32.xlu0 %v1276
      %v1278 = vpop.xlane.xlu0 %1277
      %v1279 = vsel %vm1242, %v1144, -inf
      %1280 = vmax.xlane.f32.xlu0 %v1279
      %v1281 = vpop.xlane.xlu0 %1280
      %v1282 = vsel %vm1242, %v1149, -inf
      %1283 = vmax.xlane.f32.xlu0 %v1282
      %v1284 = vpop.xlane.xlu0 %1283
      %v1285 = vsel %vm1242, %v1154, -inf
      %1286 = vmax.xlane.f32.xlu0 %v1285
      %v1287 = vpop.xlane.xlu0 %1286
      %v1288 = vsel %vm1242, %v1159, -inf
      %1289 = vmax.xlane.f32.xlu0 %v1288
      %v1290 = vpop.xlane.xlu0 %1289
      %v1291 = vsel %vm1242, %v1164, -inf
      %1292 = vmax.xlane.f32.xlu0 %v1291
      %v1293 = vpop.xlane.xlu0 %1292
      %v1294 = vsel %vm1242, %v1169, -inf
      %1295 = vmax.xlane.f32.xlu0 %v1294
      %v1296 = vpop.xlane.xlu0 %1295
      %v1297 = vsel %vm1242, %v1174, -inf
      %1298 = vmax.xlane.f32.xlu0 %v1297
      %v1299 = vpop.xlane.xlu0 %1298
      %v1300 = vsel %vm1242, %v1179, -inf
      %1301 = vmax.xlane.f32.xlu0 %v1300
      %v1302 = vpop.xlane.xlu0 %1301
      %v1303 = vsel %vm1242, %v1184, -inf
      %1304 = vmax.xlane.f32.xlu0 %v1303
      %v1305 = vpop.xlane.xlu0 %1304
      %v1306 = vsel %vm1242, %v1189, -inf
      %1307 = vmax.xlane.f32.xlu0 %v1306
      %v1308 = vpop.xlane.xlu0 %1307
      %v1309 = vsel %vm1242, %v1194, -inf
      %1310 = vmax.xlane.f32.xlu0 %v1309
      %v1311 = vpop.xlane.xlu0 %1310
      %v1312 = vsel %vm1242, %v1199, -inf
      %1313 = vmax.xlane.f32.xlu0 %v1312
      %v1314 = vpop.xlane.xlu0 %1313
      %v1315 = vsel %vm1242, %v1204, -inf
      %1316 = vmax.xlane.f32.xlu0 %v1315
      %v1317 = vpop.xlane.xlu0 %1316
      %v1318 = vsel %vm1242, %v1209, -inf
      %1319 = vmax.xlane.f32.xlu0 %v1318
      %v1320 = vpop.xlane.xlu0 %1319
      %v1321 = vsel %vm1242, %v1214, -inf
      %1322 = vmax.xlane.f32.xlu0 %v1321
      %v1323 = vpop.xlane.xlu0 %1322
      %v1324 = vsel %vm1242, %v1219, -inf
      %1325 = vmax.xlane.f32.xlu0 %v1324
      %v1326 = vpop.xlane.xlu0 %1325
      %v1327 = vsel %vm1242, %v1224, -inf
      %1328 = vmax.xlane.f32.xlu0 %v1327
      %v1329 = vpop.xlane.xlu0 %1328
      %v1330 = vsel %vm1242, %v1229, -inf
      %1331 = vmax.xlane.f32.xlu0 %v1330
      %v1332 = vpop.xlane.xlu0 %1331
      %v1333 = vsel %vm1242, %v1234, -inf
      %1334 = vmax.xlane.f32.xlu0 %v1333
      %v1335 = vpop.xlane.xlu0 %1334
      %v1336 = vsel %vm1242, %v1239, -inf
      %1337 = vmax.xlane.f32.xlu0 %v1336
      %v1338 = vpop.xlane.xlu0 %1337
      %v1339 = vsub.f32 %v1084, %v1245
      %v1340 = vsub.f32 %v1089, %v1248
      %v1341 = vsub.f32 %v1094, %v1251
      %v1342 = vsub.f32 %v1099, %v1254
      %v1343 = vsub.f32 %v1104, %v1257
      %v1344 = vsub.f32 %v1109, %v1260
      %v1345 = vsub.f32 %v1114, %v1263
      %v1346 = vsub.f32 %v1119, %v1266
      %v1347 = vsub.f32 %v1124, %v1269
      %v1348 = vsub.f32 %v1129, %v1272
      %v1349 = vsub.f32 %v1134, %v1275
      %v1350 = vsub.f32 %v1139, %v1278
      %v1351 = vsub.f32 %v1144, %v1281
      %v1352 = vsub.f32 %v1149, %v1284
      %v1353 = vsub.f32 %v1154, %v1287
      %v1354 = vsub.f32 %v1159, %v1290
      %v1355 = vsub.f32 %v1164, %v1293
      %v1356 = vsub.f32 %v1169, %v1296
      %v1357 = vsub.f32 %v1174, %v1299
      %v1358 = vsub.f32 %v1179, %v1302
      %v1359 = vsub.f32 %v1184, %v1305
      %v1360 = vsub.f32 %v1189, %v1308
      %v1361 = vsub.f32 %v1194, %v1311
      %v1362 = vsub.f32 %v1199, %v1314
      %v1363 = vsub.f32 %v1204, %v1317
      %v1364 = vsub.f32 %v1209, %v1320
      %v1365 = vsub.f32 %v1214, %v1323
      %v1366 = vsub.f32 %v1219, %v1326
      %v1367 = vsub.f32 %v1224, %v1329
      %v1368 = vsub.f32 %v1229, %v1332
      %v1369 = vsub.f32 %v1234, %v1335
      %v1370 = vsub.f32 %v1239, %v1338
      %v1371 = vmul.f32 %v1339, 1.442695
      %v1372 = vpow.pop %v1371
      %v1373 = vmul.f32 %v1340, 1.442695
      %v1374 = vpow.pop %v1373
      %v1375 = vmul.f32 %v1341, 1.442695
      %v1376 = vpow.pop %v1375
      %v1377 = vmul.f32 %v1342, 1.442695
      %v1378 = vpow.pop %v1377
      %v1379 = vmul.f32 %v1343, 1.442695
      %v1380 = vpow.pop %v1379
      %v1381 = vmul.f32 %v1344, 1.442695
      %v1382 = vpow.pop %v1381
      %v1383 = vmul.f32 %v1345, 1.442695
      %v1384 = vpow.pop %v1383
      %v1385 = vmul.f32 %v1346, 1.442695
      %v1386 = vpow.pop %v1385
      %v1387 = vmul.f32 %v1347, 1.442695
      %v1388 = vpow.pop %v1387
      %v1389 = vmul.f32 %v1348, 1.442695
      %v1390 = vpow.pop %v1389
      %v1391 = vmul.f32 %v1349, 1.442695
      %v1392 = vpow.pop %v1391
      %v1393 = vmul.f32 %v1350, 1.442695
      %v1394 = vpow.pop %v1393
      %v1395 = vmul.f32 %v1351, 1.442695
      %v1396 = vpow.pop %v1395
      %v1397 = vmul.f32 %v1352, 1.442695
      %v1398 = vpow.pop %v1397
      %v1399 = vmul.f32 %v1353, 1.442695
      %v1400 = vpow.pop %v1399
      %v1401 = vmul.f32 %v1354, 1.442695
      %v1402 = vpow.pop %v1401
      %v1403 = vmul.f32 %v1355, 1.442695
      %v1404 = vpow.pop %v1403
      %v1405 = vmul.f32 %v1356, 1.442695
      %v1406 = vpow.pop %v1405
      %v1407 = vmul.f32 %v1357, 1.442695
      %v1408 = vpow.pop %v1407
      %v1409 = vmul.f32 %v1358, 1.442695
      %v1410 = vpow.pop %v1409
      %v1411 = vmul.f32 %v1359, 1.442695
      %v1412 = vpow.pop %v1411
      %v1413 = vmul.f32 %v1360, 1.442695
      %v1414 = vpow.pop %v1413
      %v1415 = vmul.f32 %v1361, 1.442695
      %v1416 = vpow.pop %v1415
      %v1417 = vmul.f32 %v1362, 1.442695
      %v1418 = vpow.pop %v1417
      %v1419 = vmul.f32 %v1363, 1.442695
      %v1420 = vpow.pop %v1419
      %v1421 = vmul.f32 %v1364, 1.442695
      %v1422 = vpow.pop %v1421
      %v1423 = vmul.f32 %v1365, 1.442695
      %v1424 = vpow.pop %v1423
      %v1425 = vmul.f32 %v1366, 1.442695
      %v1426 = vpow.pop %v1425
      %v1427 = vmul.f32 %v1367, 1.442695
      %v1428 = vpow.pop %v1427
      %v1429 = vmul.f32 %v1368, 1.442695
      %v1430 = vpow.pop %v1429
      %v1431 = vmul.f32 %v1369, 1.442695
      %v1432 = vpow.pop %v1431
      %v1433 = vmul.f32 %v1370, 1.442695
      %v1434 = vpow.pop %v1433
      %v1435 = vsel %vm1242, %v1372, 0.0
      %1436 = vadd.xlane.f32.xlu0 %v1435
      %v1437 = vpop.xlane.xlu0 %1436
      %v1438 = vsel %vm1242, %v1374, 0.0
      %1439 = vadd.xlane.f32.xlu0 %v1438
      %v1440 = vpop.xlane.xlu0 %1439
      %v1441 = vsel %vm1242, %v1376, 0.0
      %1442 = vadd.xlane.f32.xlu0 %v1441
      %v1443 = vpop.xlane.xlu0 %1442
      %v1444 = vsel %vm1242, %v1378, 0.0
      %1445 = vadd.xlane.f32.xlu0 %v1444
      %v1446 = vpop.xlane.xlu0 %1445
      %v1447 = vsel %vm1242, %v1380, 0.0
      %1448 = vadd.xlane.f32.xlu0 %v1447
      %v1449 = vpop.xlane.xlu0 %1448
      %v1450 = vsel %vm1242, %v1382, 0.0
      %1451 = vadd.xlane.f32.xlu0 %v1450
      %v1452 = vpop.xlane.xlu0 %1451
      %v1453 = vsel %vm1242, %v1384, 0.0
      %1454 = vadd.xlane.f32.xlu0 %v1453
      %v1455 = vpop.xlane.xlu0 %1454
      %v1456 = vsel %vm1242, %v1386, 0.0
      %1457 = vadd.xlane.f32.xlu0 %v1456
      %v1458 = vpop.xlane.xlu0 %1457
      %v1459 = vsel %vm1242, %v1388, 0.0
      %1460 = vadd.xlane.f32.xlu0 %v1459
      %v1461 = vpop.xlane.xlu0 %1460
      %v1462 = vsel %vm1242, %v1390, 0.0
      %1463 = vadd.xlane.f32.xlu0 %v1462
      %v1464 = vpop.xlane.xlu0 %1463
      %v1465 = vsel %vm1242, %v1392, 0.0
      %1466 = vadd.xlane.f32.xlu0 %v1465
      %v1467 = vpop.xlane.xlu0 %1466
      %v1468 = vsel %vm1242, %v1394, 0.0
      %1469 = vadd.xlane.f32.xlu0 %v1468
      %v1470 = vpop.xlane.xlu0 %1469
      %v1471 = vsel %vm1242, %v1396, 0.0
      %1472 = vadd.xlane.f32.xlu0 %v1471
      %v1473 = vpop.xlane.xlu0 %1472
      %v1474 = vsel %vm1242, %v1398, 0.0
      %1475 = vadd.xlane.f32.xlu0 %v1474
      %v1476 = vpop.xlane.xlu0 %1475
      %v1477 = vsel %vm1242, %v1400, 0.0
      %1478 = vadd.xlane.f32.xlu0 %v1477
      %v1479 = vpop.xlane.xlu0 %1478
      %v1480 = vsel %vm1242, %v1402, 0.0
      %1481 = vadd.xlane.f32.xlu0 %v1480
      %v1482 = vpop.xlane.xlu0 %1481
      %v1483 = vsel %vm1242, %v1404, 0.0
      %1484 = vadd.xlane.f32.xlu0 %v1483
      %v1485 = vpop.xlane.xlu0 %1484
      %v1486 = vsel %vm1242, %v1406, 0.0
      %1487 = vadd.xlane.f32.xlu0 %v1486
      %v1488 = vpop.xlane.xlu0 %1487
      %v1489 = vsel %vm1242, %v1408, 0.0
      %1490 = vadd.xlane.f32.xlu0 %v1489
      %v1491 = vpop.xlane.xlu0 %1490
      %v1492 = vsel %vm1242, %v1410, 0.0
      %1493 = vadd.xlane.f32.xlu0 %v1492
      %v1494 = vpop.xlane.xlu0 %1493
      %v1495 = vsel %vm1242, %v1412, 0.0
      %1496 = vadd.xlane.f32.xlu0 %v1495
      %v1497 = vpop.xlane.xlu0 %1496
      %v1498 = vsel %vm1242, %v1414, 0.0
      %1499 = vadd.xlane.f32.xlu0 %v1498
      %v1500 = vpop.xlane.xlu0 %1499
      %v1501 = vsel %vm1242, %v1416, 0.0
      %1502 = vadd.xlane.f32.xlu0 %v1501
      %v1503 = vpop.xlane.xlu0 %1502
      %v1504 = vsel %vm1242, %v1418, 0.0
      %1505 = vadd.xlane.f32.xlu0 %v1504
      %v1506 = vpop.xlane.xlu0 %1505
      %v1507 = vsel %vm1242, %v1420, 0.0
      %1508 = vadd.xlane.f32.xlu0 %v1507
      %v1509 = vpop.xlane.xlu0 %1508
      %v1510 = vsel %vm1242, %v1422, 0.0
      %1511 = vadd.xlane.f32.xlu0 %v1510
      %v1512 = vpop.xlane.xlu0 %1511
      %v1513 = vsel %vm1242, %v1424, 0.0
      %1514 = vadd.xlane.f32.xlu0 %v1513
      %v1515 = vpop.xlane.xlu0 %1514
      %v1516 = vsel %vm1242, %v1426, 0.0
      %1517 = vadd.xlane.f32.xlu0 %v1516
      %v1518 = vpop.xlane.xlu0 %1517
      %v1519 = vsel %vm1242, %v1428, 0.0
      %1520 = vadd.xlane.f32.xlu0 %v1519
      %v1521 = vpop.xlane.xlu0 %1520
      %v1522 = vsel %vm1242, %v1430, 0.0
      %1523 = vadd.xlane.f32.xlu0 %v1522
      %v1524 = vpop.xlane.xlu0 %1523
      %v1525 = vsel %vm1242, %v1432, 0.0
      %1526 = vadd.xlane.f32.xlu0 %v1525
      %v1527 = vpop.xlane.xlu0 %1526
      %v1528 = vsel %vm1242, %v1434, 0.0
      %1529 = vadd.xlane.f32.xlu0 %v1528
      %v1530 = vpop.xlane.xlu0 %1529
      %v1531 = vrcp.pop %v1437
      %v1532 = vrcp.pop %v1440
      %v1533 = vrcp.pop %v1443
      %v1534 = vrcp.pop %v1446
      %v1535 = vrcp.pop %v1449
      %v1536 = vrcp.pop %v1452
      %v1537 = vrcp.pop %v1455
      %v1538 = vrcp.pop %v1458
      %v1539 = vrcp.pop %v1461
      %v1540 = vrcp.pop %v1464
      %v1541 = vrcp.pop %v1467
      %v1542 = vrcp.pop %v1470
      %v1543 = vrcp.pop %v1473
      %v1544 = vrcp.pop %v1476
      %v1545 = vrcp.pop %v1479
      %v1546 = vrcp.pop %v1482
      %v1547 = vrcp.pop %v1485
      %v1548 = vrcp.pop %v1488
      %v1549 = vrcp.pop %v1491
      %v1550 = vrcp.pop %v1494
      %v1551 = vrcp.pop %v1497
      %v1552 = vrcp.pop %v1500
      %v1553 = vrcp.pop %v1503
      %v1554 = vrcp.pop %v1506
      %v1555 = vrcp.pop %v1509
      %v1556 = vrcp.pop %v1512
      %v1557 = vrcp.pop %v1515
      %v1558 = vrcp.pop %v1518
      %v1559 = vrcp.pop %v1521
      %v1560 = vrcp.pop %v1524
      %v1561 = vrcp.pop %v1527
      %v1562 = vrcp.pop %v1530
      %v1563 = vmul.f32 %v1372, %v1531
      %v1564 = vmul.f32 %v1374, %v1532
      %v1565 = vmul.f32 %v1376, %v1533
      %v1566 = vmul.f32 %v1378, %v1534
      %v1567 = vmul.f32 %v1380, %v1535
      %v1568 = vmul.f32 %v1382, %v1536
      %v1569 = vmul.f32 %v1384, %v1537
      %v1570 = vmul.f32 %v1386, %v1538
      %v1571 = vmul.f32 %v1388, %v1539
      %v1572 = vmul.f32 %v1390, %v1540
      %v1573 = vmul.f32 %v1392, %v1541
      %v1574 = vmul.f32 %v1394, %v1542
      %v1575 = vmul.f32 %v1396, %v1543
      %v1576 = vmul.f32 %v1398, %v1544
      %v1577 = vmul.f32 %v1400, %v1545
      %v1578 = vmul.f32 %v1402, %v1546
      %v1579 = vmul.f32 %v1404, %v1547
      %v1580 = vmul.f32 %v1406, %v1548
      %v1581 = vmul.f32 %v1408, %v1549
      %v1582 = vmul.f32 %v1410, %v1550
      %v1583 = vmul.f32 %v1412, %v1551
      %v1584 = vmul.f32 %v1414, %v1552
      %v1585 = vmul.f32 %v1416, %v1553
      %v1586 = vmul.f32 %v1418, %v1554
      %v1587 = vmul.f32 %v1420, %v1555
      %v1588 = vmul.f32 %v1422, %v1556
      %v1589 = vmul.f32 %v1424, %v1557
      %v1590 = vmul.f32 %v1426, %v1558
      %v1591 = vmul.f32 %v1428, %v1559
      %v1592 = vmul.f32 %v1430, %v1560
      %v1593 = vmul.f32 %v1432, %v1561
      %v1594 = vmul.f32 %v1434, %v1562
      %1595 = vrot.lane.b32.xlu0 %v739, 96
      %v1596 = vpop.permute.xlu0 %1595
      %1597 = vrot.lane.b32.xlu0 %v744, 96
      %v1598 = vpop.permute.xlu0 %1597
      %1599 = vrot.lane.b32.xlu0 %v749, 96
      %v1600 = vpop.permute.xlu0 %1599
      %1601 = vrot.lane.b32.xlu0 %v754, 96
      %v1602 = vpop.permute.xlu0 %1601
      %1603 = vrot.lane.b32.xlu0 %v759, 96
      %v1604 = vpop.permute.xlu0 %1603
      %1605 = vrot.lane.b32.xlu0 %v764, 96
      %v1606 = vpop.permute.xlu0 %1605
      %1607 = vrot.lane.b32.xlu0 %v769, 96
      %v1608 = vpop.permute.xlu0 %1607
      %1609 = vrot.lane.b32.xlu0 %v774, 96
      %v1610 = vpop.permute.xlu0 %1609
      %v1620 = vsel %vm1242, %v1563, 0
      %v1623 = vsel %vm1242, %v1564, 0
      %v1626 = vsel %vm1242, %v1565, 0
      %v1629 = vsel %vm1242, %v1566, 0
      %v1632 = vsel %vm1242, %v1567, 0
      %v1635 = vsel %vm1242, %v1568, 0
      %v1638 = vsel %vm1242, %v1569, 0
      %v1641 = vsel %vm1242, %v1570, 0
      %v1644 = vsel %vm1242, %v1571, 0
      %v1647 = vsel %vm1242, %v1572, 0
      %v1650 = vsel %vm1242, %v1573, 0
      %v1653 = vsel %vm1242, %v1574, 0
      %v1656 = vsel %vm1242, %v1575, 0
      %v1659 = vsel %vm1242, %v1576, 0
      %v1662 = vsel %vm1242, %v1577, 0
      %v1665 = vsel %vm1242, %v1578, 0
      %v1668 = vsel %vm1242, %v1579, 0
      %v1671 = vsel %vm1242, %v1580, 0
      %v1674 = vsel %vm1242, %v1581, 0
      %v1677 = vsel %vm1242, %v1582, 0
      %v1680 = vsel %vm1242, %v1583, 0
      %v1683 = vsel %vm1242, %v1584, 0
      %v1686 = vsel %vm1242, %v1585, 0
      %v1689 = vsel %vm1242, %v1586, 0
      %v1692 = vsel %vm1242, %v1587, 0
      %v1695 = vsel %vm1242, %v1588, 0
      %v1698 = vsel %vm1242, %v1589, 0
      %v1701 = vsel %vm1242, %v1590, 0
      %v1704 = vsel %vm1242, %v1591, 0
      %v1707 = vsel %vm1242, %v1592, 0
      %v1710 = vsel %vm1242, %v1593, 0
      %v1713 = vsel %vm1242, %v1594, 0
      %1715 = vmatprep.subr.mxu0 0.0
      %1716 = vmatpush1.msra.mxu0 0.0
      %1717 = vmatprep.subr.mxu0 0.0
      %1718 = vmatpush1.msra.mxu0 0.0
      %1719 = vmatprep.subr.mxu0 0.0
      %1720 = vmatpush1.msra.mxu0 0.0
      %1721 = vmatprep.subr.mxu0 0.0
      %1722 = vmatpush1.msra.mxu0 0.0
      %1723 = vmatprep.subr.mxu0 0.0
      %1724 = vmatpush1.msra.mxu0 0.0
      %1725 = vmatprep.subr.mxu0 0.0
      %1726 = vmatpush1.msra.mxu0 0.0
      %1727 = vmatprep.subr.mxu0 0.0
      %1728 = vmatpush1.msra.mxu0 0.0
      %1729 = vmatprep.subr.mxu0 0.0
      %1730 = vmatpush1.msra.mxu0 0.0
      %1731 = vmatprep.subr.mxu0 0.0
      %1732 = vmatpush1.msra.mxu0 %v1610
      %1733 = vmatprep.subr.mxu0 0.0
      %1734 = vmatpush1.msra.mxu0 %v1608
      %1735 = vmatprep.subr.mxu0 0.0
      %1736 = vmatpush1.msra.mxu0 %v1606
      %1737 = vmatprep.subr.mxu0 0.0
      %1738 = vmatpush1.msra.mxu0 %v1604
      %1739 = vmatprep.subr.mxu0 0.0
      %1740 = vmatpush1.msra.mxu0 %v1602
      %1741 = vmatprep.subr.mxu0 0.0
      %1742 = vmatpush1.msra.mxu0 %v1600
      %1743 = vmatprep.subr.mxu0 0.0
      %1744 = vmatpush1.msra.mxu0 %v1598
      %1745 = vmatprep.subr.mxu0 0.0
      %1746 = vmatpush1.msra.mxu0 %v1596
      %1747 = vmatprep.subr.mxu0 0.0
      %1748 = vmatpush2.msra.mxu0 0.0
      %1749 = vmatprep.subr.mxu0 0.0
      %1750 = vmatpush2.msra.mxu0 0.0
      %1751 = vmatprep.subr.mxu0 0.0
      %1752 = vmatpush2.msra.mxu0 0.0
      %1753 = vmatprep.subr.mxu0 0.0
      %1754 = vmatpush2.msra.mxu0 0.0
      %1755 = vmatprep.subr.mxu0 0.0
      %1756 = vmatpush2.msra.mxu0 0.0
      %1757 = vmatprep.subr.mxu0 0.0
      %1758 = vmatpush2.msra.mxu0 0.0
      %1759 = vmatprep.subr.mxu0 0.0
      %1760 = vmatpush2.msra.mxu0 0.0
      %1761 = vmatprep.subr.mxu0 0.0
      %1762 = vmatpush2.msra.mxu0 0.0
      %1763 = vmatprep.subr.mxu0 0.0
      %1764 = vmatpush2.msra.mxu0 0.0
      %1765 = vmatprep.subr.mxu0 0.0
      %1766 = vmatpush2.msra.mxu0 0.0
      %1767 = vmatprep.subr.mxu0 0.0
      %1768 = vmatpush2.msra.mxu0 0.0
      %1769 = vmatprep.subr.mxu0 0.0
      %1770 = vmatpush2.msra.mxu0 0.0
      %1771 = vmatprep.subr.mxu0 0.0
      %1772 = vmatpush2.msra.mxu0 0.0
      %1773 = vmatprep.subr.mxu0 0.0
      %1774 = vmatpush2.msra.mxu0 0.0
      %1775 = vmatprep.subr.mxu0 0.0
      %1776 = vmatpush2.msra.mxu0 0.0
      %1777 = vmatprep.subr.mxu0 0.0
      %1778 = vmatpush2.msra.mxu0 0.0
      %1779 = vmatprep.mubr.f32.mxu0 0.0
      %1780 = vmatmul.mubr.f32.gmra.mxu0 %v1620
      %v1781 = vpop.f32.mrf.mxu0
      %v1782 = vadd.f32 0.0, %v1781
      %v1783 = vpop.f32.mrf.mxu0
      %1784 = vmatprep.mubr.f32.mxu0 0.0
      %1785 = vmatmul.mubr.f32.gmra.mxu0 %v1623
      %v1786 = vpop.f32.mrf.mxu0
      %v1787 = vadd.f32 0.0, %v1786
      %v1788 = vpop.f32.mrf.mxu0
      %1789 = vmatprep.mubr.f32.mxu0 0.0
      %1790 = vmatmul.mubr.f32.gmra.mxu0 %v1626
      %v1791 = vpop.f32.mrf.mxu0
      %v1792 = vadd.f32 0.0, %v1791
      %v1793 = vpop.f32.mrf.mxu0
      %1794 = vmatprep.mubr.f32.mxu0 0.0
      %1795 = vmatmul.mubr.f32.gmra.mxu0 %v1629
      %v1796 = vpop.f32.mrf.mxu0
      %v1797 = vadd.f32 0.0, %v1796
      %v1798 = vpop.f32.mrf.mxu0
      %1799 = vmatprep.mubr.f32.mxu0 0.0
      %1800 = vmatmul.mubr.f32.gmra.mxu0 %v1632
      %v1801 = vpop.f32.mrf.mxu0
      %v1802 = vadd.f32 0.0, %v1801
      %v1803 = vpop.f32.mrf.mxu0
      %1804 = vmatprep.mubr.f32.mxu0 0.0
      %1805 = vmatmul.mubr.f32.gmra.mxu0 %v1635
      %v1806 = vpop.f32.mrf.mxu0
      %v1807 = vadd.f32 0.0, %v1806
      %v1808 = vpop.f32.mrf.mxu0
      %1809 = vmatprep.mubr.f32.mxu0 0.0
      %1810 = vmatmul.mubr.f32.gmra.mxu0 %v1638
      %v1811 = vpop.f32.mrf.mxu0
      %v1812 = vadd.f32 0.0, %v1811
      %v1813 = vpop.f32.mrf.mxu0
      %1814 = vmatprep.mubr.f32.mxu0 0.0
      %1815 = vmatmul.mubr.f32.gmra.mxu0 %v1641
      %v1816 = vpop.f32.mrf.mxu0
      %v1817 = vadd.f32 0.0, %v1816
      %v1818 = vpop.f32.mrf.mxu0
      %1819 = vmatprep.mubr.f32.mxu0 0.0
      %1820 = vmatmul.mubr.f32.gmra.mxu0 %v1644
      %v1821 = vpop.f32.mrf.mxu0
      %v1822 = vadd.f32 0.0, %v1821
      %v1823 = vpop.f32.mrf.mxu0
      %1824 = vmatprep.mubr.f32.mxu0 0.0
      %1825 = vmatmul.mubr.f32.gmra.mxu0 %v1647
      %v1826 = vpop.f32.mrf.mxu0
      %v1827 = vadd.f32 0.0, %v1826
      %v1828 = vpop.f32.mrf.mxu0
      %1829 = vmatprep.mubr.f32.mxu0 0.0
      %1830 = vmatmul.mubr.f32.gmra.mxu0 %v1650
      %v1831 = vpop.f32.mrf.mxu0
      %v1832 = vadd.f32 0.0, %v1831
      %v1833 = vpop.f32.mrf.mxu0
      %1834 = vmatprep.mubr.f32.mxu0 0.0
      %1835 = vmatmul.mubr.f32.gmra.mxu0 %v1653
      %v1836 = vpop.f32.mrf.mxu0
      %v1837 = vadd.f32 0.0, %v1836
      %v1838 = vpop.f32.mrf.mxu0
      %1839 = vmatprep.mubr.f32.mxu0 0.0
      %1840 = vmatmul.mubr.f32.gmra.mxu0 %v1656
      %v1841 = vpop.f32.mrf.mxu0
      %v1842 = vadd.f32 0.0, %v1841
      %v1843 = vpop.f32.mrf.mxu0
      %1844 = vmatprep.mubr.f32.mxu0 0.0
      %1845 = vmatmul.mubr.f32.gmra.mxu0 %v1659
      %v1846 = vpop.f32.mrf.mxu0
      %v1847 = vadd.f32 0.0, %v1846
      %v1848 = vpop.f32.mrf.mxu0
      %1849 = vmatprep.mubr.f32.mxu0 0.0
      %1850 = vmatmul.mubr.f32.gmra.mxu0 %v1662
      %v1851 = vpop.f32.mrf.mxu0
      %v1852 = vadd.f32 0.0, %v1851
      %v1853 = vpop.f32.mrf.mxu0
      %1854 = vmatprep.mubr.f32.mxu0 0.0
      %1855 = vmatmul.mubr.f32.gmra.mxu0 %v1665
      %v1856 = vpop.f32.mrf.mxu0
      %v1857 = vadd.f32 0.0, %v1856
      %v1858 = vpop.f32.mrf.mxu0
      %1859 = vmatprep.mubr.f32.mxu0 0.0
      %1860 = vmatmul.mubr.f32.gmra.mxu0 %v1668
      %v1861 = vpop.f32.mrf.mxu0
      %v1862 = vadd.f32 0.0, %v1861
      %v1863 = vpop.f32.mrf.mxu0
      %1864 = vmatprep.mubr.f32.mxu0 0.0
      %1865 = vmatmul.mubr.f32.gmra.mxu0 %v1671
      %v1866 = vpop.f32.mrf.mxu0
      %v1867 = vadd.f32 0.0, %v1866
      %v1868 = vpop.f32.mrf.mxu0
      %1869 = vmatprep.mubr.f32.mxu0 0.0
      %1870 = vmatmul.mubr.f32.gmra.mxu0 %v1674
      %v1871 = vpop.f32.mrf.mxu0
      %v1872 = vadd.f32 0.0, %v1871
      %v1873 = vpop.f32.mrf.mxu0
      %1874 = vmatprep.mubr.f32.mxu0 0.0
      %1875 = vmatmul.mubr.f32.gmra.mxu0 %v1677
      %v1876 = vpop.f32.mrf.mxu0
      %v1877 = vadd.f32 0.0, %v1876
      %v1878 = vpop.f32.mrf.mxu0
      %1879 = vmatprep.mubr.f32.mxu0 0.0
      %1880 = vmatmul.mubr.f32.gmra.mxu0 %v1680
      %v1881 = vpop.f32.mrf.mxu0
      %v1882 = vadd.f32 0.0, %v1881
      %v1883 = vpop.f32.mrf.mxu0
      %1884 = vmatprep.mubr.f32.mxu0 0.0
      %1885 = vmatmul.mubr.f32.gmra.mxu0 %v1683
      %v1886 = vpop.f32.mrf.mxu0
      %v1887 = vadd.f32 0.0, %v1886
      %v1888 = vpop.f32.mrf.mxu0
      %1889 = vmatprep.mubr.f32.mxu0 0.0
      %1890 = vmatmul.mubr.f32.gmra.mxu0 %v1686
      %v1891 = vpop.f32.mrf.mxu0
      %v1892 = vadd.f32 0.0, %v1891
      %v1893 = vpop.f32.mrf.mxu0
      %1894 = vmatprep.mubr.f32.mxu0 0.0
      %1895 = vmatmul.mubr.f32.gmra.mxu0 %v1689
      %v1896 = vpop.f32.mrf.mxu0
      %v1897 = vadd.f32 0.0, %v1896
      %v1898 = vpop.f32.mrf.mxu0
      %1899 = vmatprep.mubr.f32.mxu0 0.0
      %1900 = vmatmul.mubr.f32.gmra.mxu0 %v1692
      %v1901 = vpop.f32.mrf.mxu0
      %v1902 = vadd.f32 0.0, %v1901
      %v1903 = vpop.f32.mrf.mxu0
      %1904 = vmatprep.mubr.f32.mxu0 0.0
      %1905 = vmatmul.mubr.f32.gmra.mxu0 %v1695
      %v1906 = vpop.f32.mrf.mxu0
      %v1907 = vadd.f32 0.0, %v1906
      %v1908 = vpop.f32.mrf.mxu0
      %1909 = vmatprep.mubr.f32.mxu0 0.0
      %1910 = vmatmul.mubr.f32.gmra.mxu0 %v1698
      %v1911 = vpop.f32.mrf.mxu0
      %v1912 = vadd.f32 0.0, %v1911
      %v1913 = vpop.f32.mrf.mxu0
      %1914 = vmatprep.mubr.f32.mxu0 0.0
      %1915 = vmatmul.mubr.f32.gmra.mxu0 %v1701
      %v1916 = vpop.f32.mrf.mxu0
      %v1917 = vadd.f32 0.0, %v1916
      %v1918 = vpop.f32.mrf.mxu0
      %1919 = vmatprep.mubr.f32.mxu0 0.0
      %1920 = vmatmul.mubr.f32.gmra.mxu0 %v1704
      %v1921 = vpop.f32.mrf.mxu0
      %v1922 = vadd.f32 0.0, %v1921
      %v1923 = vpop.f32.mrf.mxu0
      %1924 = vmatprep.mubr.f32.mxu0 0.0
      %1925 = vmatmul.mubr.f32.gmra.mxu0 %v1707
      %v1926 = vpop.f32.mrf.mxu0
      %v1927 = vadd.f32 0.0, %v1926
      %v1928 = vpop.f32.mrf.mxu0
      %1929 = vmatprep.mubr.f32.mxu0 0.0
      %1930 = vmatmul.mubr.f32.gmra.mxu0 %v1710
      %v1931 = vpop.f32.mrf.mxu0
      %v1932 = vadd.f32 0.0, %v1931
      %v1933 = vpop.f32.mrf.mxu0
      %1934 = vmatprep.mubr.f32.mxu0 0.0
      %1935 = vmatmul.mubr.f32.gmra.mxu0 %v1713
      %v1936 = vpop.f32.mrf.mxu0
      %v1937 = vadd.f32 0.0, %v1936
      %v1938 = vpop.f32.mrf.mxu0
      %1939 = vdwg.mxu0
      %v1940 = vmul.f32 %v1782, %v785
      %v1941 = vmul.f32 %v1787, %v786
      %v1942 = vmul.f32 %v1792, %v787
      %v1943 = vmul.f32 %v1797, %v788
      %v1944 = vmul.f32 %v1802, %v789
      %v1945 = vmul.f32 %v1807, %v790
      %v1946 = vmul.f32 %v1812, %v791
      %v1947 = vmul.f32 %v1817, %v792
      %v1948 = vmul.f32 %v1822, %v793
      %v1949 = vmul.f32 %v1827, %v794
      %v1950 = vmul.f32 %v1832, %v795
      %v1951 = vmul.f32 %v1837, %v796
      %v1952 = vmul.f32 %v1842, %v797
      %v1953 = vmul.f32 %v1847, %v798
      %v1954 = vmul.f32 %v1852, %v799
      %v1955 = vmul.f32 %v1857, %v800
      %v1956 = vmul.f32 %v1862, %v801
      %v1957 = vmul.f32 %v1867, %v802
      %v1958 = vmul.f32 %v1872, %v803
      %v1959 = vmul.f32 %v1877, %v804
      %v1960 = vmul.f32 %v1882, %v805
      %v1961 = vmul.f32 %v1887, %v806
      %v1962 = vmul.f32 %v1892, %v807
      %v1963 = vmul.f32 %v1897, %v808
      %v1964 = vmul.f32 %v1902, %v809
      %v1965 = vmul.f32 %v1907, %v810
      %v1966 = vmul.f32 %v1912, %v811
      %v1967 = vmul.f32 %v1917, %v812
      %v1968 = vmul.f32 %v1922, %v813
      %v1969 = vmul.f32 %v1927, %v814
      %v1970 = vmul.f32 %v1932, %v815
      %v1971 = vmul.f32 %v1937, %v816
      %v1972 = vsel %vm503, %v1940, 0.0
      %v1973 = vsel %vm503, %v1948, 0.0
      %v1974 = vadd.f32 %v1972, %v1973
      %v1975 = vsel %vm503, %v1956, 0.0
      %v1976 = vadd.f32 %v1974, %v1975
      %v1977 = vsel %vm503, %v1964, 0.0
      %v1978 = vadd.f32 %v1976, %v1977
      %v1979 = vsel %vm503, %v1941, 0.0
      %v1980 = vsel %vm503, %v1949, 0.0
      %v1981 = vadd.f32 %v1979, %v1980
      %v1982 = vsel %vm503, %v1957, 0.0
      %v1983 = vadd.f32 %v1981, %v1982
      %v1984 = vsel %vm503, %v1965, 0.0
      %v1985 = vadd.f32 %v1983, %v1984
      %v1986 = vsel %vm503, %v1942, 0.0
      %v1987 = vsel %vm503, %v1950, 0.0
      %v1988 = vadd.f32 %v1986, %v1987
      %v1989 = vsel %vm503, %v1958, 0.0
      %v1990 = vadd.f32 %v1988, %v1989
      %v1991 = vsel %vm503, %v1966, 0.0
      %v1992 = vadd.f32 %v1990, %v1991
      %v1993 = vsel %vm503, %v1943, 0.0
      %v1994 = vsel %vm503, %v1951, 0.0
      %v1995 = vadd.f32 %v1993, %v1994
      %v1996 = vsel %vm503, %v1959, 0.0
      %v1997 = vadd.f32 %v1995, %v1996
      %v1998 = vsel %vm503, %v1967, 0.0
      %v1999 = vadd.f32 %v1997, %v1998
      %v2000 = vsel %vm503, %v1944, 0.0
      %v2001 = vsel %vm503, %v1952, 0.0
      %v2002 = vadd.f32 %v2000, %v2001
      %v2003 = vsel %vm503, %v1960, 0.0
      %v2004 = vadd.f32 %v2002, %v2003
      %v2005 = vsel %vm503, %v1968, 0.0
      %v2006 = vadd.f32 %v2004, %v2005
      %v2007 = vsel %vm503, %v1945, 0.0
      %v2008 = vsel %vm503, %v1953, 0.0
      %v2009 = vadd.f32 %v2007, %v2008
      %v2010 = vsel %vm503, %v1961, 0.0
      %v2011 = vadd.f32 %v2009, %v2010
      %v2012 = vsel %vm503, %v1969, 0.0
      %v2013 = vadd.f32 %v2011, %v2012
      %v2014 = vsel %vm503, %v1946, 0.0
      %v2015 = vsel %vm503, %v1954, 0.0
      %v2016 = vadd.f32 %v2014, %v2015
      %v2017 = vsel %vm503, %v1962, 0.0
      %v2018 = vadd.f32 %v2016, %v2017
      %v2019 = vsel %vm503, %v1970, 0.0
      %v2020 = vadd.f32 %v2018, %v2019
      %v2021 = vsel %vm503, %v1947, 0.0
      %v2022 = vsel %vm503, %v1955, 0.0
      %v2023 = vadd.f32 %v2021, %v2022
      %v2024 = vsel %vm503, %v1963, 0.0
      %v2025 = vadd.f32 %v2023, %v2024
      %v2026 = vsel %vm503, %v1971, 0.0
      %v2027 = vadd.f32 %v2025, %v2026
      %v2028 = vld [vmem:[%s5] sm:$0xff]
      %v2029 = vld [vmem:[%s5 + $0x8] sm:$0xff]
      %v2030 = vld [vmem:[%s6] sm:$0x1]
      %v2032 = vlaneseq
      %v2033 = vshrl.u32 %v2032, 7
      %v2034 = vsub.s32 0, %v2033
      %v2035 = vrot.slane %v2030, %v2034
      %v2038 = vsel %vm503, %v1978, 0
      %v2041 = vsel %vm503, %v1985, 0
      %v2044 = vsel %vm503, %v1992, 0
      %v2047 = vsel %vm503, %v1999, 0
      %v2050 = vsel %vm503, %v2006, 0
      %v2053 = vsel %vm503, %v2013, 0
      %v2056 = vsel %vm503, %v2020, 0
      %v2059 = vsel %vm503, %v2027, 0
      %2061 = vmatprep.subr.mxu0 0.0
      %2062 = vmatpush1.msra.mxu0 0.0
      %2063 = vmatprep.subr.mxu0 0.0
      %2064 = vmatpush1.msra.mxu0 0.0
      %2065 = vmatprep.subr.mxu0 0.0
      %2066 = vmatpush1.msra.mxu0 0.0
      %2067 = vmatprep.subr.mxu0 0.0
      %2068 = vmatpush1.msra.mxu0 0.0
      %2069 = vmatprep.subr.mxu0 0.0
      %2070 = vmatpush1.msra.mxu0 0.0
      %2071 = vmatprep.subr.mxu0 0.0
      %2072 = vmatpush1.msra.mxu0 0.0
      %2073 = vmatprep.subr.mxu0 0.0
      %2074 = vmatpush1.msra.mxu0 0.0
      %2075 = vmatprep.subr.mxu0 0.0
      %2076 = vmatpush1.msra.mxu0 0.0
      %2077 = vmatprep.subr.mxu0 0.0
      %2078 = vmatpush1.msra.mxu0 0.0
      %2079 = vmatprep.subr.mxu0 0.0
      %2080 = vmatpush1.msra.mxu0 0.0
      %2081 = vmatprep.subr.mxu0 0.0
      %2082 = vmatpush1.msra.mxu0 0.0
      %2083 = vmatprep.subr.mxu0 0.0
      %2084 = vmatpush1.msra.mxu0 0.0
      %2085 = vmatprep.subr.mxu0 0.0
      %2086 = vmatpush1.msra.mxu0 0.0
      %2087 = vmatprep.subr.mxu0 0.0
      %2088 = vmatpush1.msra.mxu0 0.0
      %2089 = vmatprep.subr.mxu0 0.0
      %2090 = vmatpush1.msra.mxu0 %v2029
      %2091 = vmatprep.subr.mxu0 0.0
      %2092 = vmatpush1.msra.mxu0 %v2028
      %2093 = vmatprep.subr.mxu0 0.0
      %2094 = vmatpush2.msra.mxu0 0.0
      %2095 = vmatprep.subr.mxu0 0.0
      %2096 = vmatpush2.msra.mxu0 0.0
      %2097 = vmatprep.subr.mxu0 0.0
      %2098 = vmatpush2.msra.mxu0 0.0
      %2099 = vmatprep.subr.mxu0 0.0
      %2100 = vmatpush2.msra.mxu0 0.0
      %2101 = vmatprep.subr.mxu0 0.0
      %2102 = vmatpush2.msra.mxu0 0.0
      %2103 = vmatprep.subr.mxu0 0.0
      %2104 = vmatpush2.msra.mxu0 0.0
      %2105 = vmatprep.subr.mxu0 0.0
      %2106 = vmatpush2.msra.mxu0 0.0
      %2107 = vmatprep.subr.mxu0 0.0
      %2108 = vmatpush2.msra.mxu0 0.0
      %2109 = vmatprep.subr.mxu0 0.0
      %2110 = vmatpush2.msra.mxu0 0.0
      %2111 = vmatprep.subr.mxu0 0.0
      %2112 = vmatpush2.msra.mxu0 0.0
      %2113 = vmatprep.subr.mxu0 0.0
      %2114 = vmatpush2.msra.mxu0 0.0
      %2115 = vmatprep.subr.mxu0 0.0
      %2116 = vmatpush2.msra.mxu0 0.0
      %2117 = vmatprep.subr.mxu0 0.0
      %2118 = vmatpush2.msra.mxu0 0.0
      %2119 = vmatprep.subr.mxu0 0.0
      %2120 = vmatpush2.msra.mxu0 0.0
      %2121 = vmatprep.subr.mxu0 0.0
      %2122 = vmatpush2.msra.mxu0 0.0
      %2123 = vmatprep.subr.mxu0 0.0
      %2124 = vmatpush2.msra.mxu0 0.0
      %2125 = vmatprep.mubr.f32.mxu0 0.0
      %2126 = vmatmul.mubr.f32.gmra.mxu0 %v2038
      %v2127 = vpop.f32.mrf.mxu0
      %v2128 = vadd.f32 %v2035, %v2127
      %v2129 = vpop.f32.mrf.mxu0
      %2130 = vmatprep.mubr.f32.mxu0 0.0
      %2131 = vmatmul.mubr.f32.gmra.mxu0 %v2041
      %v2132 = vpop.f32.mrf.mxu0
      %v2133 = vadd.f32 %v2035, %v2132
      %v2134 = vpop.f32.mrf.mxu0
      %2135 = vmatprep.mubr.f32.mxu0 0.0
      %2136 = vmatmul.mubr.f32.gmra.mxu0 %v2044
      %v2137 = vpop.f32.mrf.mxu0
      %v2138 = vadd.f32 %v2035, %v2137
      %v2139 = vpop.f32.mrf.mxu0
      %2140 = vmatprep.mubr.f32.mxu0 0.0
      %2141 = vmatmul.mubr.f32.gmra.mxu0 %v2047
      %v2142 = vpop.f32.mrf.mxu0
      %v2143 = vadd.f32 %v2035, %v2142
      %v2144 = vpop.f32.mrf.mxu0
      %2145 = vmatprep.mubr.f32.mxu0 0.0
      %2146 = vmatmul.mubr.f32.gmra.mxu0 %v2050
      %v2147 = vpop.f32.mrf.mxu0
      %v2148 = vadd.f32 %v2035, %v2147
      %v2149 = vpop.f32.mrf.mxu0
      %2150 = vmatprep.mubr.f32.mxu0 0.0
      %2151 = vmatmul.mubr.f32.gmra.mxu0 %v2053
      %v2152 = vpop.f32.mrf.mxu0
      %v2153 = vadd.f32 %v2035, %v2152
      %v2154 = vpop.f32.mrf.mxu0
      %2155 = vmatprep.mubr.f32.mxu0 0.0
      %2156 = vmatmul.mubr.f32.gmra.mxu0 %v2056
      %v2157 = vpop.f32.mrf.mxu0
      %v2158 = vadd.f32 %v2035, %v2157
      %v2159 = vpop.f32.mrf.mxu0
      %2160 = vmatprep.mubr.f32.mxu0 0.0
      %2161 = vmatmul.mubr.f32.gmra.mxu0 %v2059
      %v2162 = vpop.f32.mrf.mxu0
      %v2163 = vadd.f32 %v2035, %v2162
      %v2164 = vpop.f32.mrf.mxu0
      %2165 = vdwg.mxu0
      %v2166 = vadd.f32 %v495, %v2128
      %v2167 = vadd.f32 %v496, %v2133
      %v2168 = vadd.f32 %v497, %v2138
      %v2169 = vadd.f32 %v498, %v2143
      %v2170 = vadd.f32 %v499, %v2148
      %v2171 = vadd.f32 %v500, %v2153
      %v2172 = vadd.f32 %v501, %v2158
      %v2173 = vadd.f32 %v502, %v2163
      %v2174 = vsel %vm503, %v2166, 0.0
      %2175 = vadd.xlane.f32.xlu0 %v2174
      %v2176 = vpop.xlane.xlu0 %2175
      %v2177 = vsel %vm503, %v2167, 0.0
      %2178 = vadd.xlane.f32.xlu0 %v2177
      %v2179 = vpop.xlane.xlu0 %2178
      %v2180 = vsel %vm503, %v2168, 0.0
      %2181 = vadd.xlane.f32.xlu0 %v2180
      %v2182 = vpop.xlane.xlu0 %2181
      %v2183 = vsel %vm503, %v2169, 0.0
      %2184 = vadd.xlane.f32.xlu0 %v2183
      %v2185 = vpop.xlane.xlu0 %2184
      %v2186 = vsel %vm503, %v2170, 0.0
      %2187 = vadd.xlane.f32.xlu0 %v2186
      %v2188 = vpop.xlane.xlu0 %2187
      %v2189 = vsel %vm503, %v2171, 0.0
      %2190 = vadd.xlane.f32.xlu0 %v2189
      %v2191 = vpop.xlane.xlu0 %2190
      %v2192 = vsel %vm503, %v2172, 0.0
      %2193 = vadd.xlane.f32.xlu0 %v2192
      %v2194 = vpop.xlane.xlu0 %2193
      %v2195 = vsel %vm503, %v2173, 0.0
      %2196 = vadd.xlane.f32.xlu0 %v2195
      %v2197 = vpop.xlane.xlu0 %2196
      %v2198 = vmul.f32 %v2176, %v528
      %v2199 = vmul.f32 %v2179, %v528
      %v2200 = vmul.f32 %v2182, %v528
      %v2201 = vmul.f32 %v2185, %v528
      %v2202 = vmul.f32 %v2188, %v528
      %v2203 = vmul.f32 %v2191, %v528
      %v2204 = vmul.f32 %v2194, %v528
      %v2205 = vmul.f32 %v2197, %v528
      %v2206 = vsub.f32 %v2166, %v2198
      %v2207 = vsub.f32 %v2167, %v2199
      %v2208 = vsub.f32 %v2168, %v2200
      %v2209 = vsub.f32 %v2169, %v2201
      %v2210 = vsub.f32 %v2170, %v2202
      %v2211 = vsub.f32 %v2171, %v2203
      %v2212 = vsub.f32 %v2172, %v2204
      %v2213 = vsub.f32 %v2173, %v2205
      %v2214 = vmul.f32 %v2206, %v2206
      %v2215 = vmul.f32 %v2207, %v2207
      %v2216 = vmul.f32 %v2208, %v2208
      %v2217 = vmul.f32 %v2209, %v2209
      %v2218 = vmul.f32 %v2210, %v2210
      %v2219 = vmul.f32 %v2211, %v2211
      %v2220 = vmul.f32 %v2212, %v2212
      %v2221 = vmul.f32 %v2213, %v2213
      %v2222 = vsel %vm503, %v2214, 0.0
      %2223 = vadd.xlane.f32.xlu0 %v2222
      %v2224 = vpop.xlane.xlu0 %2223
      %v2225 = vsel %vm503, %v2215, 0.0
      %2226 = vadd.xlane.f32.xlu0 %v2225
      %v2227 = vpop.xlane.xlu0 %2226
      %v2228 = vsel %vm503, %v2216, 0.0
      %2229 = vadd.xlane.f32.xlu0 %v2228
      %v2230 = vpop.xlane.xlu0 %2229
      %v2231 = vsel %vm503, %v2217, 0.0
      %2232 = vadd.xlane.f32.xlu0 %v2231
      %v2233 = vpop.xlane.xlu0 %2232
      %v2234 = vsel %vm503, %v2218, 0.0
      %2235 = vadd.xlane.f32.xlu0 %v2234
      %v2236 = vpop.xlane.xlu0 %2235
      %v2237 = vsel %vm503, %v2219, 0.0
      %2238 = vadd.xlane.f32.xlu0 %v2237
      %v2239 = vpop.xlane.xlu0 %2238
      %v2240 = vsel %vm503, %v2220, 0.0
      %2241 = vadd.xlane.f32.xlu0 %v2240
      %v2242 = vpop.xlane.xlu0 %2241
      %v2243 = vsel %vm503, %v2221, 0.0
      %2244 = vadd.xlane.f32.xlu0 %v2243
      %v2245 = vpop.xlane.xlu0 %2244
      %v2246 = vmul.f32 %v2224, %v528
      %v2247 = vmul.f32 %v2227, %v528
      %v2248 = vmul.f32 %v2230, %v528
      %v2249 = vmul.f32 %v2233, %v528
      %v2250 = vmul.f32 %v2236, %v528
      %v2251 = vmul.f32 %v2239, %v528
      %v2252 = vmul.f32 %v2242, %v528
      %v2253 = vmul.f32 %v2245, %v528
      %v2254 = vadd.f32 %v2246, 1e-05
      %v2255 = vadd.f32 %v2247, 1e-05
      %v2256 = vadd.f32 %v2248, 1e-05
      %v2257 = vadd.f32 %v2249, 1e-05
      %v2258 = vadd.f32 %v2250, 1e-05
      %v2259 = vadd.f32 %v2251, 1e-05
      %v2260 = vadd.f32 %v2252, 1e-05
      %v2261 = vadd.f32 %v2253, 1e-05
      %v2262 = vrsqrt.pop %v2254
      %v2263 = vrsqrt.pop %v2255
      %v2264 = vrsqrt.pop %v2256
      %v2265 = vrsqrt.pop %v2257
      %v2266 = vrsqrt.pop %v2258
      %v2267 = vrsqrt.pop %v2259
      %v2268 = vrsqrt.pop %v2260
      %v2269 = vrsqrt.pop %v2261
      %v2270 = vmul.f32 %v2206, %v2262
      %v2271 = vmul.f32 %v2207, %v2263
      %v2272 = vmul.f32 %v2208, %v2264
      %v2273 = vmul.f32 %v2209, %v2265
      %v2274 = vmul.f32 %v2210, %v2266
      %v2275 = vmul.f32 %v2211, %v2267
      %v2276 = vmul.f32 %v2212, %v2268
      %v2277 = vmul.f32 %v2213, %v2269
      %v2278 = vld [vmem:[%s9] sm:$0x1]
      %v2280 = vlaneseq
      %v2281 = vshrl.u32 %v2280, 7
      %v2282 = vsub.s32 0, %v2281
      %v2283 = vrot.slane %v2278, %v2282
      %v2285 = vmul.f32 %v2270, %v2283
      %v2286 = vmul.f32 %v2271, %v2283
      %v2287 = vmul.f32 %v2272, %v2283
      %v2288 = vmul.f32 %v2273, %v2283
      %v2289 = vmul.f32 %v2274, %v2283
      %v2290 = vmul.f32 %v2275, %v2283
      %v2291 = vmul.f32 %v2276, %v2283
      %v2292 = vmul.f32 %v2277, %v2283
      %v2293 = vld [vmem:[%s10] sm:$0x1]
      %v2295 = vlaneseq
      %v2296 = vshrl.u32 %v2295, 7
      %v2297 = vsub.s32 0, %v2296
      %v2298 = vrot.slane %v2293, %v2297
      %v2300 = vadd.f32 %v2285, %v2298
      %v2301 = vadd.f32 %v2286, %v2298
      %v2302 = vadd.f32 %v2287, %v2298
      %v2303 = vadd.f32 %v2288, %v2298
      %v2304 = vadd.f32 %v2289, %v2298
      %v2305 = vadd.f32 %v2290, %v2298
      %v2306 = vadd.f32 %v2291, %v2298
      %v2307 = vadd.f32 %v2292, %v2298
      %v2308 = vld [vmem:[%s11] sm:$0xff]
      %v2309 = vld [vmem:[%s11 + $0x8] sm:$0xff]
      %v2310 = vld [vmem:[%s12] sm:$0x1]
      %v2312 = vlaneseq
      %v2313 = vshrl.u32 %v2312, 7
      %v2314 = vsub.s32 0, %v2313
      %v2315 = vrot.slane %v2310, %v2314
      %v2318 = vsel %vm503, %v2300, 0
      %v2321 = vsel %vm503, %v2301, 0
      %v2324 = vsel %vm503, %v2302, 0
      %v2327 = vsel %vm503, %v2303, 0
      %v2330 = vsel %vm503, %v2304, 0
      %v2333 = vsel %vm503, %v2305, 0
      %v2336 = vsel %vm503, %v2306, 0
      %v2339 = vsel %vm503, %v2307, 0
      %2341 = vmatprep.subr.mxu0 0.0
      %2342 = vmatpush1.msra.mxu0 0.0
      %2343 = vmatprep.subr.mxu0 0.0
      %2344 = vmatpush1.msra.mxu0 0.0
      %2345 = vmatprep.subr.mxu0 0.0
      %2346 = vmatpush1.msra.mxu0 0.0
      %2347 = vmatprep.subr.mxu0 0.0
      %2348 = vmatpush1.msra.mxu0 0.0
      %2349 = vmatprep.subr.mxu0 0.0
      %2350 = vmatpush1.msra.mxu0 0.0
      %2351 = vmatprep.subr.mxu0 0.0
      %2352 = vmatpush1.msra.mxu0 0.0
      %2353 = vmatprep.subr.mxu0 0.0
      %2354 = vmatpush1.msra.mxu0 0.0
      %2355 = vmatprep.subr.mxu0 0.0
      %2356 = vmatpush1.msra.mxu0 0.0
      %2357 = vmatprep.subr.mxu0 0.0
      %2358 = vmatpush1.msra.mxu0 0.0
      %2359 = vmatprep.subr.mxu0 0.0
      %2360 = vmatpush1.msra.mxu0 0.0
      %2361 = vmatprep.subr.mxu0 0.0
      %2362 = vmatpush1.msra.mxu0 0.0
      %2363 = vmatprep.subr.mxu0 0.0
      %2364 = vmatpush1.msra.mxu0 0.0
      %2365 = vmatprep.subr.mxu0 0.0
      %2366 = vmatpush1.msra.mxu0 0.0
      %2367 = vmatprep.subr.mxu0 0.0
      %2368 = vmatpush1.msra.mxu0 0.0
      %2369 = vmatprep.subr.mxu0 0.0
      %2370 = vmatpush1.msra.mxu0 %v2309
      %2371 = vmatprep.subr.mxu0 0.0
      %2372 = vmatpush1.msra.mxu0 %v2308
      %2373 = vmatprep.subr.mxu0 0.0
      %2374 = vmatpush2.msra.mxu0 0.0
      %2375 = vmatprep.subr.mxu0 0.0
      %2376 = vmatpush2.msra.mxu0 0.0
      %2377 = vmatprep.subr.mxu0 0.0
      %2378 = vmatpush2.msra.mxu0 0.0
      %2379 = vmatprep.subr.mxu0 0.0
      %2380 = vmatpush2.msra.mxu0 0.0
      %2381 = vmatprep.subr.mxu0 0.0
      %2382 = vmatpush2.msra.mxu0 0.0
      %2383 = vmatprep.subr.mxu0 0.0
      %2384 = vmatpush2.msra.mxu0 0.0
      %2385 = vmatprep.subr.mxu0 0.0
      %2386 = vmatpush2.msra.mxu0 0.0
      %2387 = vmatprep.subr.mxu0 0.0
      %2388 = vmatpush2.msra.mxu0 0.0
      %2389 = vmatprep.subr.mxu0 0.0
      %2390 = vmatpush2.msra.mxu0 0.0
      %2391 = vmatprep.subr.mxu0 0.0
      %2392 = vmatpush2.msra.mxu0 0.0
      %2393 = vmatprep.subr.mxu0 0.0
      %2394 = vmatpush2.msra.mxu0 0.0
      %2395 = vmatprep.subr.mxu0 0.0
      %2396 = vmatpush2.msra.mxu0 0.0
      %2397 = vmatprep.subr.mxu0 0.0
      %2398 = vmatpush2.msra.mxu0 0.0
      %2399 = vmatprep.subr.mxu0 0.0
      %2400 = vmatpush2.msra.mxu0 0.0
      %2401 = vmatprep.subr.mxu0 0.0
      %2402 = vmatpush2.msra.mxu0 0.0
      %2403 = vmatprep.subr.mxu0 0.0
      %2404 = vmatpush2.msra.mxu0 0.0
      %2405 = vmatprep.mubr.f32.mxu0 0.0
      %2406 = vmatmul.mubr.f32.gmra.mxu0 %v2318
      %v2407 = vpop.f32.mrf.mxu0
      %v2408 = vadd.f32 %v2315, %v2407
      %v2409 = vpop.f32.mrf.mxu0
      %2410 = vmatprep.mubr.f32.mxu0 0.0
      %2411 = vmatmul.mubr.f32.gmra.mxu0 %v2321
      %v2412 = vpop.f32.mrf.mxu0
      %v2413 = vadd.f32 %v2315, %v2412
      %v2414 = vpop.f32.mrf.mxu0
      %2415 = vmatprep.mubr.f32.mxu0 0.0
      %2416 = vmatmul.mubr.f32.gmra.mxu0 %v2324
      %v2417 = vpop.f32.mrf.mxu0
      %v2418 = vadd.f32 %v2315, %v2417
      %v2419 = vpop.f32.mrf.mxu0
      %2420 = vmatprep.mubr.f32.mxu0 0.0
      %2421 = vmatmul.mubr.f32.gmra.mxu0 %v2327
      %v2422 = vpop.f32.mrf.mxu0
      %v2423 = vadd.f32 %v2315, %v2422
      %v2424 = vpop.f32.mrf.mxu0
      %2425 = vmatprep.mubr.f32.mxu0 0.0
      %2426 = vmatmul.mubr.f32.gmra.mxu0 %v2330
      %v2427 = vpop.f32.mrf.mxu0
      %v2428 = vadd.f32 %v2315, %v2427
      %v2429 = vpop.f32.mrf.mxu0
      %2430 = vmatprep.mubr.f32.mxu0 0.0
      %2431 = vmatmul.mubr.f32.gmra.mxu0 %v2333
      %v2432 = vpop.f32.mrf.mxu0
      %v2433 = vadd.f32 %v2315, %v2432
      %v2434 = vpop.f32.mrf.mxu0
      %2435 = vmatprep.mubr.f32.mxu0 0.0
      %2436 = vmatmul.mubr.f32.gmra.mxu0 %v2336
      %v2437 = vpop.f32.mrf.mxu0
      %v2438 = vadd.f32 %v2315, %v2437
      %v2439 = vpop.f32.mrf.mxu0
      %2440 = vmatprep.mubr.f32.mxu0 0.0
      %2441 = vmatmul.mubr.f32.gmra.mxu0 %v2339
      %v2442 = vpop.f32.mrf.mxu0
      %v2443 = vadd.f32 %v2315, %v2442
      %v2444 = vpop.f32.mrf.mxu0
      %2445 = vdwg.mxu0
      %v2446 = vmul.f32 %v2408, 0.5
      %v2447 = vmul.f32 %v2413, 0.5
      %v2448 = vmul.f32 %v2418, 0.5
      %v2449 = vmul.f32 %v2423, 0.5
      %v2450 = vmul.f32 %v2428, 0.5
      %v2451 = vmul.f32 %v2433, 0.5
      %v2452 = vmul.f32 %v2438, 0.5
      %v2453 = vmul.f32 %v2443, 0.5
      %v2454 = vmul.f32 %v2408, 0.70710677
      %v2455 = vmul.f32 %v2413, 0.70710677
      %v2456 = vmul.f32 %v2418, 0.70710677
      %v2457 = vmul.f32 %v2423, 0.70710677
      %v2458 = vmul.f32 %v2428, 0.70710677
      %v2459 = vmul.f32 %v2433, 0.70710677
      %v2460 = vmul.f32 %v2438, 0.70710677
      %v2461 = vmul.f32 %v2443, 0.70710677
      %v2462 = verf.f32.pop %v2454
      %v2463 = verf.f32.pop %v2455
      %v2464 = verf.f32.pop %v2456
      %v2465 = verf.f32.pop %v2457
      %v2466 = verf.f32.pop %v2458
      %v2467 = verf.f32.pop %v2459
      %v2468 = verf.f32.pop %v2460
      %v2469 = verf.f32.pop %v2461
      %v2470 = vadd.f32 %v2462, 1.0
      %v2471 = vadd.f32 %v2463, 1.0
      %v2472 = vadd.f32 %v2464, 1.0
      %v2473 = vadd.f32 %v2465, 1.0
      %v2474 = vadd.f32 %v2466, 1.0
      %v2475 = vadd.f32 %v2467, 1.0
      %v2476 = vadd.f32 %v2468, 1.0
      %v2477 = vadd.f32 %v2469, 1.0
      %v2478 = vmul.f32 %v2446, %v2470
      %v2479 = vmul.f32 %v2447, %v2471
      %v2480 = vmul.f32 %v2448, %v2472
      %v2481 = vmul.f32 %v2449, %v2473
      %v2482 = vmul.f32 %v2450, %v2474
      %v2483 = vmul.f32 %v2451, %v2475
      %v2484 = vmul.f32 %v2452, %v2476
      %v2485 = vmul.f32 %v2453, %v2477
      %v2486 = vld [vmem:[%s13] sm:$0xff]
      %v2487 = vld [vmem:[%s13 + $0x8] sm:$0xff]
      %v2488 = vld [vmem:[%s13 + $0x10] sm:$0xff]
      %v2489 = vld [vmem:[%s13 + $0x18] sm:$0xff]
      %v2490 = vld [vmem:[%s13 + $0x20] sm:$0xff]
      %v2491 = vld [vmem:[%s13 + $0x28] sm:$0xff]
      %v2492 = vld [vmem:[%s13 + $0x30] sm:$0xff]
      %v2493 = vld [vmem:[%s13 + $0x38] sm:$0xff]
      %v2495 = vsel %vm1242, %v2478, 0
      %v2498 = vsel %vm1242, %v2479, 0
      %v2501 = vsel %vm1242, %v2480, 0
      %v2504 = vsel %vm1242, %v2481, 0
      %v2507 = vsel %vm1242, %v2482, 0
      %v2510 = vsel %vm1242, %v2483, 0
      %v2513 = vsel %vm1242, %v2484, 0
      %v2516 = vsel %vm1242, %v2485, 0
      %2518 = vmatprep.subr.mxu0 0.0
      %2519 = vmatpush1.msra.mxu0 0.0
      %2520 = vmatprep.subr.mxu0 0.0
      %2521 = vmatpush1.msra.mxu0 0.0
      %2522 = vmatprep.subr.mxu0 0.0
      %2523 = vmatpush1.msra.mxu0 0.0
      %2524 = vmatprep.subr.mxu0 0.0
      %2525 = vmatpush1.msra.mxu0 0.0
      %2526 = vmatprep.subr.mxu0 0.0
      %2527 = vmatpush1.msra.mxu0 0.0
      %2528 = vmatprep.subr.mxu0 0.0
      %2529 = vmatpush1.msra.mxu0 0.0
      %2530 = vmatprep.subr.mxu0 0.0
      %2531 = vmatpush1.msra.mxu0 0.0
      %2532 = vmatprep.subr.mxu0 0.0
      %2533 = vmatpush1.msra.mxu0 0.0
      %2534 = vmatprep.subr.mxu0 0.0
      %2535 = vmatpush1.msra.mxu0 %v2493
      %2536 = vmatprep.subr.mxu0 0.0
      %2537 = vmatpush1.msra.mxu0 %v2492
      %2538 = vmatprep.subr.mxu0 0.0
      %2539 = vmatpush1.msra.mxu0 %v2491
      %2540 = vmatprep.subr.mxu0 0.0
      %2541 = vmatpush1.msra.mxu0 %v2490
      %2542 = vmatprep.subr.mxu0 0.0
      %2543 = vmatpush1.msra.mxu0 %v2489
      %2544 = vmatprep.subr.mxu0 0.0
      %2545 = vmatpush1.msra.mxu0 %v2488
      %2546 = vmatprep.subr.mxu0 0.0
      %2547 = vmatpush1.msra.mxu0 %v2487
      %2548 = vmatprep.subr.mxu0 0.0
      %2549 = vmatpush1.msra.mxu0 %v2486
      %2550 = vmatprep.subr.mxu0 0.0
      %2551 = vmatpush2.msra.mxu0 0.0
      %2552 = vmatprep.subr.mxu0 0.0
      %2553 = vmatpush2.msra.mxu0 0.0
      %2554 = vmatprep.subr.mxu0 0.0
      %2555 = vmatpush2.msra.mxu0 0.0
      %2556 = vmatprep.subr.mxu0 0.0
      %2557 = vmatpush2.msra.mxu0 0.0
      %2558 = vmatprep.subr.mxu0 0.0
      %2559 = vmatpush2.msra.mxu0 0.0
      %2560 = vmatprep.subr.mxu0 0.0
      %2561 = vmatpush2.msra.mxu0 0.0
      %2562 = vmatprep.subr.mxu0 0.0
      %2563 = vmatpush2.msra.mxu0 0.0
      %2564 = vmatprep.subr.mxu0 0.0
      %2565 = vmatpush2.msra.mxu0 0.0
      %2566 = vmatprep.subr.mxu0 0.0
      %2567 = vmatpush2.msra.mxu0 0.0
      %2568 = vmatprep.subr.mxu0 0.0
      %2569 = vmatpush2.msra.mxu0 0.0
      %2570 = vmatprep.subr.mxu0 0.0
      %2571 = vmatpush2.msra.mxu0 0.0
      %2572 = vmatprep.subr.mxu0 0.0
      %2573 = vmatpush2.msra.mxu0 0.0
      %2574 = vmatprep.subr.mxu0 0.0
      %2575 = vmatpush2.msra.mxu0 0.0
      %2576 = vmatprep.subr.mxu0 0.0
      %2577 = vmatpush2.msra.mxu0 0.0
      %2578 = vmatprep.subr.mxu0 0.0
      %2579 = vmatpush2.msra.mxu0 0.0
      %2580 = vmatprep.subr.mxu0 0.0
      %2581 = vmatpush2.msra.mxu0 0.0
      %2582 = vmatprep.mubr.f32.mxu0 0.0
      %2583 = vmatmul.mubr.f32.gmra.mxu0 %v2495
      %v2584 = vpop.f32.mrf.mxu0
      %v2585 = vadd.f32 0.0, %v2584
      %v2586 = vpop.f32.mrf.mxu0
      %2587 = vmatprep.mubr.f32.mxu0 0.0
      %2588 = vmatmul.mubr.f32.gmra.mxu0 %v2498
      %v2589 = vpop.f32.mrf.mxu0
      %v2590 = vadd.f32 0.0, %v2589
      %v2591 = vpop.f32.mrf.mxu0
      %2592 = vmatprep.mubr.f32.mxu0 0.0
      %2593 = vmatmul.mubr.f32.gmra.mxu0 %v2501
      %v2594 = vpop.f32.mrf.mxu0
      %v2595 = vadd.f32 0.0, %v2594
      %v2596 = vpop.f32.mrf.mxu0
      %2597 = vmatprep.mubr.f32.mxu0 0.0
      %2598 = vmatmul.mubr.f32.gmra.mxu0 %v2504
      %v2599 = vpop.f32.mrf.mxu0
      %v2600 = vadd.f32 0.0, %v2599
      %v2601 = vpop.f32.mrf.mxu0
      %2602 = vmatprep.mubr.f32.mxu0 0.0
      %2603 = vmatmul.mubr.f32.gmra.mxu0 %v2507
      %v2604 = vpop.f32.mrf.mxu0
      %v2605 = vadd.f32 0.0, %v2604
      %v2606 = vpop.f32.mrf.mxu0
      %2607 = vmatprep.mubr.f32.mxu0 0.0
      %2608 = vmatmul.mubr.f32.gmra.mxu0 %v2510
      %v2609 = vpop.f32.mrf.mxu0
      %v2610 = vadd.f32 0.0, %v2609
      %v2611 = vpop.f32.mrf.mxu0
      %2612 = vmatprep.mubr.f32.mxu0 0.0
      %2613 = vmatmul.mubr.f32.gmra.mxu0 %v2513
      %v2614 = vpop.f32.mrf.mxu0
      %v2615 = vadd.f32 0.0, %v2614
      %v2616 = vpop.f32.mrf.mxu0
      %2617 = vmatprep.mubr.f32.mxu0 0.0
      %2618 = vmatmul.mubr.f32.gmra.mxu0 %v2516
      %v2619 = vpop.f32.mrf.mxu0
      %v2620 = vadd.f32 0.0, %v2619
      %v2621 = vpop.f32.mrf.mxu0
      %2622 = vdwg.mxu0
      %v2623 = vadd.f32 %v2166, %v2585
      %v2624 = vadd.f32 %v2167, %v2590
      %v2625 = vadd.f32 %v2168, %v2595
      %v2626 = vadd.f32 %v2169, %v2600
      %v2627 = vadd.f32 %v2170, %v2605
      %v2628 = vadd.f32 %v2171, %v2610
      %v2629 = vadd.f32 %v2172, %v2615
      %v2630 = vadd.f32 %v2173, %v2620
      %v2631 = vld [vmem:[%s14] sm:$0x1]
      %v2633 = vlaneseq
      %v2634 = vshrl.u32 %v2633, 7
      %v2635 = vsub.s32 0, %v2634
      %v2636 = vrot.slane %v2631, %v2635
      %v2638 = vadd.f32 %v2623, %v2636
      %v2639 = vadd.f32 %v2624, %v2636
      %v2640 = vadd.f32 %v2625, %v2636
      %v2641 = vadd.f32 %v2626, %v2636
      %v2642 = vadd.f32 %v2627, %v2636
      %v2643 = vadd.f32 %v2628, %v2636
      %v2644 = vadd.f32 %v2629, %v2636
      %v2645 = vadd.f32 %v2630, %v2636
      %2646 = vst.msk [vmem:[%s494] sm:$0xff] %vm503, %v2638
      %2647 = vst.msk [vmem:[%s494 + $0x8] sm:$0xff] %vm503, %v2639
      %2648 = vst.msk [vmem:[%s494 + $0x10] sm:$0xff] %vm503, %v2640
      %2649 = vst.msk [vmem:[%s494 + $0x18] sm:$0xff] %vm503, %v2641
      %2650 = vst.msk [vmem:[%s494 + $0x20] sm:$0xff] %vm503, %v2642
      %2651 = vst.msk [vmem:[%s494 + $0x28] sm:$0xff] %vm503, %v2643
      %2652 = vst.msk [vmem:[%s494 + $0x30] sm:$0xff] %vm503, %v2644
      %2653 = vst.msk [vmem:[%s494 + $0x38] sm:$0xff] %vm503, %v2645
      %p2654 = scmp.lt.s32.totalorder %s26, 1
      %s2655 = scalar_select %p2654, %s26, 1
      %s2656 = smul.addr %s2655, 8
      %s2657 = smul.addr %s2656, 8
      %s2658 = scalar_lea.vmem %s15, %s2657
      // Predicated region
      $region81: #{swin_block_forward.1} parent=79 // pred_check
        %p2659 = pneg %p364
      $region82: #{swin_block_forward.1} parent=79 // pred_check_branch
        %2661 = sbr.rel (%p2659) target = $region84
      $region83: #{swin_block_forward.1} parent=79 // pred_region
        _
      $region84: #{swin_block_forward.1} parent=79 // pred_fallthru
        _
    $region80: #{swin_block_forward.1} parent=5 // pred_fallthru
      _
    %p2662 = scmp.le.s32.totalorder 2, %s21
    // Predicated region
    $region85: #{swin_block_forward.1} parent=5 // pred_check
      %p2663 = pneg %p2662
    $region86: #{swin_block_forward.1} parent=5 // pred_check_branch
      %2665 = sbr.rel (%p2663) target = $region88
    $region87: #{swin_block_forward.1} parent=5 // pred_region
      %s2666 = ssub.s32 %s21, 2
      // Predicated region
      $region89: #{swin_block_forward.1} parent=87 // pred_check
        %p2667 = pneg %p370
      $region90: #{swin_block_forward.1} parent=87 // pred_check_branch
        %2669 = sbr.rel (%p2667) target = $region92
      $region91: #{swin_block_forward.1} parent=87 // pred_region
        %p2670 = scmp.lt.s32.totalorder %s27, 1
        %s2671 = scalar_select %p2670, %s27, 1
        %s2672 = smul.addr %s2671, 8
        %s2673 = smul.addr %s2672, 8
        %s2674 = scalar_lea.vmem %s15, %s2673
      $region92: #{swin_block_forward.1} parent=87 // pred_fallthru
        _
    $region88: #{swin_block_forward.1} parent=5 // pred_fallthru
      _
  $region6: #{swin_block_forward.1} parent=0 // loop_footer
    %s25 = sadd.s32 1, %s21
  $region7: #{swin_block_forward.1} parent=0 // loop_footer_branch
    %20 = sbr.rel target = $region3
  $region8: #{swin_block_forward.1} parent=0 // loop_exit
    _

</llo_original>
